<compile_context>
chip_gen: v6e
topology: v6e:2x2x1
jax: 0.10.0
libtpu: 0.0.40
codegen_flags: <defaults>
</compile_context>

<pallas_src>
import math

import jax
import jax.numpy as jnp
from jax.experimental import pallas as pl
from jax.experimental.pallas import tpu as pltpu

MASK_VALUE = -1e9
LN_EPS = 1e-5


# ----------------------------- shared math (usable inside & outside Pallas) -------------------

def _layer_norm(x, gamma, beta):
    mu = jnp.mean(x, axis=-1, keepdims=True)
    var = jnp.mean(jnp.square(x - mu), axis=-1, keepdims=True)
    return (x - mu) * jax.lax.rsqrt(var + LN_EPS) * gamma + beta


def _ffn_act(x):
    # TODO(synk): the original repo's PositionwiseFeedForward activation is not shown; the
    # GPT2-style code this module derives from uses Swish (x * sigmoid(x)), used here.
    return x * (1.0 / (1.0 + jnp.exp(-x)))


# ----------------------------------- Pallas kernel ---------------------------------------------

def _make_layers_kernel(num_heads, bidirectional, ffn_chunk, emit_ctx):
    """Kernel over grid=(batch, layer): full decoder layer per step + fused head LN on last."""

    def kernel(x_ref, pad_ref,
               ln_a_g, ln_a_b, wqkv, bqkv, wo, bo,
               ln_f_g, ln_f_b, w1, b1, w2, b2,
               ln_h_g, ln_h_b,
               *outs):
        if emit_ctx:
            y_ref, k_ref, v_ref, att_sc = outs
        else:
            y_ref, att_sc = outs

        l = pl.program_id(1)

        # Layer 0: seed the VMEM-resident residual stream (y block is revisited across the
        # "arbitrary" layer axis, so it never leaves VMEM between layers).
        @pl.when(l == 0)
        def _():
            y_ref[...] = x_ref[...]

        x = y_ref[...]                       # (S, H) float32 residual stream
        S, H = x.shape
        d = H // num_heads
        cdt = jnp.bfloat16                   # MXU operand dtype (accumulation stays f32)

        # --- attention mask built in-kernel (no (B,S,S) HBM traffic) ---
        key_is_pad = pad_ref[...] > 0.0      # (1, S): True where the key token is padding
        if bidirectional:
            masked = key_is_pad              # broadcasts over query rows
        else:
            q_idx = jax.lax.broadcasted_iota(jnp.int32, (S, S), 0)
            k_idx = jax.lax.broadcasted_iota(jnp.int32, (S, S), 1)
            masked = key_is_pad | (k_idx > q_idx)          # (S, S)

        # --- self-attention sub-layer ---
        h = _layer_norm(x, ln_a_g[...], ln_a_b[...]).astype(cdt)
        # Fused QKV projection: one (S,H)@(H,3H) MXU pass; 1/sqrt(d) pre-folded into wq/bq.
        qkv = jnp.dot(h, wqkv[...], preferred_element_type=jnp.float32) + bqkv[...]   # (S, 3H)
        qb = qkv[:, 0:H].astype(cdt)
        kb = qkv[:, H:2 * H].astype(cdt)
        vb = qkv[:, 2 * H:3 * H].astype(cdt)

        if emit_ctx:
            # new attention contexts (ctx_len == 0 path): bf16 halves writeback bytes
            k_ref[...] = kb
            v_ref[...] = vb

        # Per-head scores; each head's context is written to its column slot of a bf16 (S,H)
        # scratch so the output projection below is ONE full-depth (S,H)@(H,H) matmul.
        # TODO(synk): lax.fori_loop over heads + flash-style S tiling for large num_heads / S.
        for hh in range(num_heads):
            lo = hh * d
            qh = qb[:, lo:lo + d]
            kh = kb[:, lo:lo + d]
            vh = vb[:, lo:lo + d]
            s = jax.lax.dot_general(qh, kh, (((1,), (1,)), ((), ())),
                                    preferred_element_type=jnp.float32)     # (S, S)
            s = jnp.where(masked, MASK_VALUE, s)
            s = s - jnp.max(s, axis=-1, keepdims=True)
            p = jnp.exp(s)
            p = p * pl.reciprocal(jnp.sum(p, axis=-1, keepdims=True), approx=True)
            ah = jnp.dot(p.astype(cdt), vh, preferred_element_type=jnp.float32)       # (S, d)
            att_sc[:, lo:lo + d] = ah.astype(cdt)

        att = jnp.dot(att_sc[...], wo[...], preferred_element_type=jnp.float32) + bo[...]
        x1 = x + att

        # --- position-wise feed-forward sub-layer, chunked over F ---
        h2 = _layer_norm(x1, ln_f_g[...], ln_f_b[...]).astype(cdt)
        F = w1.shape[1]
        ff = jnp.zeros((S, H), jnp.float32)
        for flo in range(0, F, ffn_chunk):
            fhi = min(flo + ffn_chunk, F)
            g = _ffn_act(jnp.dot(h2, w1[:, flo:fhi], preferred_element_type=jnp.float32)
                         + b1[:, flo:fhi])
            ff = ff + jnp.dot(g.astype(cdt), w2[flo:fhi, :],
                              preferred_element_type=jnp.float32)
        y = x1 + ff + b2[...]

        y_ref[...] = y
        # Fuse the final ln_head into the epilogue of the LAST layer (no extra kernel/HBM trip).
        @pl.when(l == pl.num_programs(1) - 1)
        def _():
            y_ref[...] = _layer_norm(y, ln_h_g[...], ln_h_b[...])

    return kernel


# ----------------------------------- wrappers ---------------------------------------------------

def _vmem_limit_bytes():
    # v7x has 64 MiB/TC (vs 128 MiB on v5e/v6e): never request the full physical capacity.
    try:
        cap = pltpu.get_tpu_info().vmem_capacity_bytes
        return min(int(cap * 3 // 4), 96 * 1024 * 1024)
    except Exception:
        return 64 * 1024 * 1024


def pack_params(params, num_heads):
    """One-time parameter prep: fuse QKV, fold 1/sqrt(d) into q, stack all layers along L."""
    layers = params["layers"]
    H = params["word_emb"].shape[1]
    d = H // num_heads
    scale = 1.0 / math.sqrt(d)

    wqkv, bqkv = [], []
    for lp in layers:
        wq = (lp["wq"].astype(jnp.float32) * scale).astype(lp["wq"].dtype)
        bq = lp["bq"] * scale
        wqkv.append(jnp.concatenate([wq, lp["wk"], lp["wv"]], axis=1))     # (H, 3H) bf16
        bqkv.append(jnp.concatenate([bq, lp["bk"], lp["bv"]], axis=1))     # (1, 3H) f32

    stack = lambda name: jnp.stack([lp[name] for lp in layers], axis=0)
    packed = {
        "word_emb": params["word_emb"],
        "pos_emb": params["pos_emb"],
        "ln_head_g": params["ln_head_g"],
        "ln_head_b": params["ln_head_b"],
        "wqkv": jnp.stack(wqkv, axis=0),     # (L, H, 3H) bf16
        "bqkv": jnp.stack(bqkv, axis=0),     # (L, 1, 3H) f32
        "ln_a_g": stack("ln_a_g"), "ln_a_b": stack("ln_a_b"),
        "wo": stack("wo"), "bo": stack("bo"),
        "ln_f_g": stack("ln_f_g"), "ln_f_b": stack("ln_f_b"),
        "w1": stack("w1"), "b1": stack("b1"),
        "w2": stack("w2"), "b2": stack("b2"),
    }
    return packed


def transformer_layers(x, pad, packed, num_heads, bidirectional, return_ctxs):
    B, S, H = x.shape
    L, _, F = packed["w1"].shape
    ffn_chunk = min(F, 2048)

    per_batch = lambda b, l: (b, 0, 0)
    per_layer = lambda b, l: (l, 0, 0)
    const2 = lambda b, l: (0, 0)

    in_specs = [
        pl.BlockSpec((None, S, H), per_batch),        # x (read once per batch)
        pl.BlockSpec((None, 1, S), per_batch),        # pad flags (tiny; mask built in-kernel)
        pl.BlockSpec((None, 1, H), per_layer),        # ln_a_g
        pl.BlockSpec((None, 1, H), per_layer),        # ln_a_b
        pl.BlockSpec((None, H, 3 * H), per_layer),    # wqkv (prefetched for layer l+1)
        pl.BlockSpec((None, 1, 3 * H), per_layer),    # bqkv
        pl.BlockSpec((None, H, H), per_layer),        # wo
        pl.BlockSpec((None, 1, H), per_layer),        # bo
        pl.BlockSpec((None, 1, H), per_layer),        # ln_f_g
        pl.BlockSpec((None, 1, H), per_layer),        # ln_f_b
        pl.BlockSpec((None, H, F), per_layer),        # w1
        pl.BlockSpec((None, 1, F), per_layer),        # b1
        pl.BlockSpec((None, F, H), per_layer),        # w2
        pl.BlockSpec((None, 1, H), per_layer),        # b2
        pl.BlockSpec((1, H), const2),                 # ln_head_g (used only on last layer)
        pl.BlockSpec((1, H), const2),                 # ln_head_b
    ]
    out_specs = [pl.BlockSpec((None, S, H), per_batch)]                      # y: VMEM-resident
    out_shape = [jax.ShapeDtypeStruct((B, S, H), jnp.float32)]
    if return_ctxs:
        ctx_spec = pl.BlockSpec((None, None, S, H), lambda b, l: (b, l, 0, 0))
        out_specs += [ctx_spec, ctx_spec]
        out_shape += [jax.ShapeDtypeStruct((B, L, S, H), jnp.bfloat16)] * 2

    kern = _make_layers_kernel(num_heads, bidirectional, ffn_chunk, return_ctxs)
    outs = pl.pallas_call(
        kern,
        grid=(B, L),
        in_specs=in_specs,
        out_specs=tuple(out_specs),
        out_shape=tuple(out_shape),
        scratch_shapes=[pltpu.VMEM((S, H), jnp.bfloat16)],   # concatenated per-head contexts
        compiler_params=pltpu.CompilerParams(
            # batch axis shards across TensorCores (v7x); layer axis is a sequential carry.
            dimension_semantics=("parallel", "arbitrary"),
            vmem_limit_bytes=_vmem_limit_bytes(),
        ),
    )(x, pad,
      packed["ln_a_g"], packed["ln_a_b"], packed["wqkv"], packed["bqkv"],
      packed["wo"], packed["bo"], packed["ln_f_g"], packed["ln_f_b"],
      packed["w1"], packed["b1"], packed["w2"], packed["b2"],
      packed["ln_head_g"], packed["ln_head_b"])

    if return_ctxs:
        y, k_all, v_all = outs
        ctxs = [(k_all[:, i], v_all[:, i]) for i in range(L)]
    else:
        y = outs[0] if isinstance(outs, (tuple, list)) else outs
        ctxs = []
    return y, ctxs


def transformer_forward(ids, packed, num_heads, pad_idx, bidirectional=False, return_ctxs=True):
    # TODO(synk): ctxs != None (incremental decoding with a key/value cache offset) not implemented.
    B, S = ids.shape
    pad = (ids == pad_idx).astype(jnp.float32)[:, None, :]          # (B, 1, S)

    # Embedding gather stays in plain JAX (no clean Pallas gather path needed here).
    x = jnp.take(packed["word_emb"], ids, axis=0) + packed["pos_emb"][None, :S, :]
    # dropout: identity in eval mode

    L = packed["wqkv"].shape[0]
    if L == 0:                                                      # degenerate case
        return _layer_norm(x, packed["ln_head_g"], packed["ln_head_b"]), []

    return transformer_layers(x, pad, packed, num_heads, bidirectional, return_ctxs)


# ----------------------------------- pure-JAX reference ------------------------------------------

def build_mask(ids, pad_idx, bidirectional):
    B, S = ids.shape
    is_pad = (ids == pad_idx)
    mask = jnp.broadcast_to(is_pad[:, None, :], (B, S, S))
    if not bidirectional:
        future = jnp.triu(jnp.ones((S, S), dtype=bool), k=1)
        mask = mask | future[None]
    return mask


def reference_forward(ids, params, num_heads, pad_idx, bidirectional=False):
    B, S = ids.shape
    H = params["word_emb"].shape[1]
    d = H // num_heads
    mask = build_mask(ids, pad_idx, bidirectional)
    f32 = lambda a: a.astype(jnp.float32)

    x = jnp.take(params["word_emb"], ids, axis=0) + params["pos_emb"][None, :S, :]
    for lp in params["layers"]:
        h = _layer_norm(x, lp["ln_a_g"], lp["ln_a_b"])
        q = h @ f32(lp["wq"]) + lp["bq"]
        k = h @ f32(lp["wk"]) + lp["bk"]
        v = h @ f32(lp["wv"]) + lp["bv"]
        outs = []
        for hh in range(num_heads):
            lo, hi = hh * d, (hh + 1) * d
            s = jnp.einsum("bqd,bkd->bqk", q[..., lo:hi], k[..., lo:hi]) / math.sqrt(d)
            s = jnp.where(mask, MASK_VALUE, s)
            p = jax.nn.softmax(s, axis=-1)
            outs.append(jnp.einsum("bqk,bkd->bqd", p, v[..., lo:hi]))
        att = jnp.concatenate(outs, axis=-1)
        x = x + (att @ f32(lp["wo"]) + lp["bo"])
        h2 = _layer_norm(x, lp["ln_f_g"], lp["ln_f_b"])
        f = _ffn_act(h2 @ f32(lp["w1"]) + lp["b1"]) @ f32(lp["w2"]) + lp["b2"]
        x = x + f
    x = _layer_norm(x, params["ln_head_g"], params["ln_head_b"])
    return x


# ----------------------------------- parameter init ----------------------------------------------

def init_params(key, num_words, seq_len, num_layers, hidden_dims, bottleneck):
    H, F = hidden_dims, hidden_dims * bottleneck
    wdt = jnp.bfloat16   # weights stored bf16 (MXU operand dtype); biases/LN/embeddings f32
    keys = jax.random.split(key, 2 + num_layers)
    params = {
        "word_emb": 0.02 * jax.random.normal(keys[0], (num_words, H), jnp.float32),
        "pos_emb": 0.02 * jax.random.normal(keys[1], (seq_len, H), jnp.float32),
        "ln_head_g": jnp.ones((1, H), jnp.float32),
        "ln_head_b": jnp.zeros((1, H), jnp.float32),
        "layers": [],
    }
    for i in range(num_layers):
        kq, kk, kv, ko, k1, k2 = jax.random.split(keys[2 + i], 6)
        params["layers"].append({
            "ln_a_g": jnp.ones((1, H), jnp.float32),
            "ln_a_b": jnp.zeros((1, H), jnp.float32),
            "wq": (0.02 * jax.random.normal(kq, (H, H), jnp.float32)).astype(wdt),
            "bq": jnp.zeros((1, H), jnp.float32),
            "wk": (0.02 * jax.random.normal(kk, (H, H), jnp.float32)).astype(wdt),
            "bk": jnp.zeros((1, H), jnp.float32),
            "wv": (0.02 * jax.random.normal(kv, (H, H), jnp.float32)).astype(wdt),
            "bv": jnp.zeros((1, H), jnp.float32),
            "wo": (0.02 * jax.random.normal(ko, (H, H), jnp.float32)).astype(wdt),
            "bo": jnp.zeros((1, H), jnp.float32),
            "ln_f_g": jnp.ones((1, H), jnp.float32),
            "ln_f_b": jnp.zeros((1, H), jnp.float32),
            "w1": (0.02 * jax.random.normal(k1, (H, F), jnp.float32)).astype(wdt),
            "b1": jnp.zeros((1, F), jnp.float32),
            "w2": (0.02 * jax.random.normal(k2, (F, H), jnp.float32)).astype(wdt),
            "b2": jnp.zeros((1, H), jnp.float32),
        })
    return params


# ----------------------------------- main ---------------------------------------------------------

if __name__ == "__main__":
    # NOTE: toy shapes; real deployments should pad H to a multiple of 128 (lane-dense stores)
    # and S to a multiple of 8.
    num_words, seq_len, pad_idx = 64, 8, 0
    num_layers, num_heads, hidden_dims, bottleneck = 2, 4, 32, 4
    B, S = 2, seq_len

    key = jax.random.PRNGKey(0)
    pkey, ikey = jax.random.split(key)
    params = init_params(pkey, num_words, seq_len, num_layers, hidden_dims, bottleneck)
    packed = pack_params(params, num_heads)   # one-time prep: fuse QKV, fold scale, stack layers

    ids = jax.random.randint(ikey, (B, S), 1, num_words)   # no pad tokens -> well-defined rows
    ids = ids.at[1, S - 1].set(pad_idx)                     # exercise pad masking on one position

    out, new_ctxs = transformer_forward(ids, packed, num_heads, pad_idx, bidirectional=False)
    out = jax.block_until_ready(out)

    ref = reference_forward(ids, params, num_heads, pad_idx, bidirectional=False)
    assert out.shape == (B, S, hidden_dims)
    assert len(new_ctxs) == num_layers
    assert new_ctxs[0][0].shape == (B, S, hidden_dims)
    assert new_ctxs[0][0].dtype == jnp.bfloat16 and new_ctxs[0][1].dtype == jnp.bfloat16
    # Tolerance accounts for bf16 MXU operands + EUP approx reciprocal vs the f32 reference.
    max_err = jnp.max(jnp.abs(out - ref))
    assert jnp.allclose(out, ref, rtol=3e-2, atol=3e-2), f"kernel mismatch, max abs err={max_err}"

    print("KERNEL_OK")
</pallas_src>

<mosaic_0001>
module attributes {stable_mosaic.version = 11 : i64} {
  func.func @kernel(%arg0: i32, %arg1: i32, %arg2: memref<1x8x32xf32, #tpu.memory_space<vmem>>, %arg3: memref<1x1x8xf32, #tpu.memory_space<vmem>>, %arg4: memref<1x1x32xf32, #tpu.memory_space<vmem>>, %arg5: memref<1x1x32xf32, #tpu.memory_space<vmem>>, %arg6: memref<1x32x96xbf16, #tpu.memory_space<vmem>>, %arg7: memref<1x1x96xf32, #tpu.memory_space<vmem>>, %arg8: memref<1x32x32xbf16, #tpu.memory_space<vmem>>, %arg9: memref<1x1x32xf32, #tpu.memory_space<vmem>>, %arg10: memref<1x1x32xf32, #tpu.memory_space<vmem>>, %arg11: memref<1x1x32xf32, #tpu.memory_space<vmem>>, %arg12: memref<1x32x128xbf16, #tpu.memory_space<vmem>>, %arg13: memref<1x1x128xf32, #tpu.memory_space<vmem>>, %arg14: memref<1x128x32xbf16, #tpu.memory_space<vmem>>, %arg15: memref<1x1x32xf32, #tpu.memory_space<vmem>>, %arg16: memref<1x32xf32, #tpu.memory_space<vmem>>, %arg17: memref<1x32xf32, #tpu.memory_space<vmem>>, %arg18: memref<1x8x32xf32, #tpu.memory_space<vmem>>, %arg19: memref<1x1x8x32xbf16, #tpu.memory_space<vmem>>, %arg20: memref<1x1x8x32xbf16, #tpu.memory_space<vmem>>, %arg21: memref<8x32xbf16, #tpu.memory_space<vmem>>) attributes {dimension_semantics = [#tpu.dimension_semantics<parallel>, #tpu.dimension_semantics<arbitrary>], iteration_bounds = array<i64: 2, 2>, scalar_prefetch = 0 : i64, scratch_operands = 1 : i64, tpu.core_type = #tpu.core_type<tc>, window_params = [{transform_indices = @transform_0, window_bounds = array<i64: 1, 8, 32>}, {transform_indices = @transform_1, window_bounds = array<i64: 1, 1, 8>}, {transform_indices = @transform_2, window_bounds = array<i64: 1, 1, 32>}, {transform_indices = @transform_3, window_bounds = array<i64: 1, 1, 32>}, {transform_indices = @transform_4, window_bounds = array<i64: 1, 32, 96>}, {transform_indices = @transform_5, window_bounds = array<i64: 1, 1, 96>}, {transform_indices = @transform_6, window_bounds = array<i64: 1, 32, 32>}, {transform_indices = @transform_7, window_bounds = array<i64: 1, 1, 32>}, {transform_indices = @transform_8, window_bounds = array<i64: 1, 1, 32>}, {transform_indices = @transform_9, window_bounds = array<i64: 1, 1, 32>}, {transform_indices = @transform_10, window_bounds = array<i64: 1, 32, 128>}, {transform_indices = @transform_11, window_bounds = array<i64: 1, 1, 128>}, {transform_indices = @transform_12, window_bounds = array<i64: 1, 128, 32>}, {transform_indices = @transform_13, window_bounds = array<i64: 1, 1, 32>}, {pipeline_mode = #tpu.pipeline_mode<synchronous>, transform_indices = @transform_14, window_bounds = array<i64: 1, 32>}, {pipeline_mode = #tpu.pipeline_mode<synchronous>, transform_indices = @transform_15, window_bounds = array<i64: 1, 32>}, {transform_indices = @transform_16, window_bounds = array<i64: 1, 8, 32>}, {transform_indices = @transform_17, window_bounds = array<i64: 1, 1, 8, 32>}, {transform_indices = @transform_18, window_bounds = array<i64: 1, 1, 8, 32>}]} {
    %c0_i32 = arith.constant 0 : i32
    %0 = arith.cmpi eq, %arg1, %c0_i32 : i32
    %1 = arith.extui %0 : i1 to i32
    %c0_i32_0 = arith.constant 0 : i32
    %2 = arith.cmpi ne, %1, %c0_i32_0 : i32
    scf.if %2 {
      %c0_99 = arith.constant 0 : index
      %c0_100 = arith.constant 0 : index
      %c0_101 = arith.constant 0 : index
      %208 = vector.load %arg2[%c0_99, %c0_100, %c0_101] : memref<1x8x32xf32, #tpu.memory_space<vmem>>, vector<1x8x32xf32>
      %209 = vector.shape_cast %208 : vector<1x8x32xf32> to vector<8x32xf32>
      %c0_102 = arith.constant 0 : index
      %c0_103 = arith.constant 0 : index
      %c0_104 = arith.constant 0 : index
      %210 = vector.load %arg18[%c0_102, %c0_103, %c0_104] : memref<1x8x32xf32, #tpu.memory_space<vmem>>, vector<1x8x32xf32>
      %211 = vector.shape_cast %210 : vector<1x8x32xf32> to vector<8x32xf32>
      %212 = vector.shape_cast %209 : vector<8x32xf32> to vector<1x8x32xf32>
      tpu.vector_store %arg18[%c0_102, %c0_103, %c0_104], %212 {strides = array<i32>} : memref<1x8x32xf32, #tpu.memory_space<vmem>>, vector<1x8x32xf32>,
    } else {
    }
    %c0 = arith.constant 0 : index
    %c0_1 = arith.constant 0 : index
    %c0_2 = arith.constant 0 : index
    %3 = vector.load %arg18[%c0, %c0_1, %c0_2] : memref<1x8x32xf32, #tpu.memory_space<vmem>>, vector<1x8x32xf32>
    %4 = vector.shape_cast %3 : vector<1x8x32xf32> to vector<8x32xf32>
    %c0_3 = arith.constant 0 : index
    %c0_4 = arith.constant 0 : index
    %c0_5 = arith.constant 0 : index
    %5 = vector.load %arg3[%c0_3, %c0_4, %c0_5] : memref<1x1x8xf32, #tpu.memory_space<vmem>>, vector<1x1x8xf32>
    %6 = vector.shape_cast %5 : vector<1x1x8xf32> to vector<1x8xf32>
    %cst = arith.constant 0.000000e+00 : f32
    %7 = vector.broadcast %cst : f32 to vector<1x8xf32>
    %8 = arith.cmpf ogt, %6, %7 : vector<1x8xf32>
    %9 = tpu.iota {dimensions = array<i32: 0>} : vector<8x8xi32>
    %10 = tpu.iota {dimensions = array<i32: 1>} : vector<8x8xi32>
    %11 = arith.cmpi sgt, %10, %9 : vector<8x8xi32>
    %12 = vector.broadcast %8 : vector<1x8xi1> to vector<8x8xi1>
    %13 = arith.ori %12, %11 : vector<8x8xi1>
    %c0_6 = arith.constant 0 : index
    %c0_7 = arith.constant 0 : index
    %c0_8 = arith.constant 0 : index
    %14 = vector.load %arg4[%c0_6, %c0_7, %c0_8] : memref<1x1x32xf32, #tpu.memory_space<vmem>>, vector<1x1x32xf32>
    %15 = vector.shape_cast %14 : vector<1x1x32xf32> to vector<1x32xf32>
    %c0_9 = arith.constant 0 : index
    %c0_10 = arith.constant 0 : index
    %c0_11 = arith.constant 0 : index
    %16 = vector.load %arg5[%c0_9, %c0_10, %c0_11] : memref<1x1x32xf32, #tpu.memory_space<vmem>>, vector<1x1x32xf32>
    %17 = vector.shape_cast %16 : vector<1x1x32xf32> to vector<1x32xf32>
    %cst_12 = arith.constant dense<0.000000e+00> : vector<8xf32>
    %18 = vector.multi_reduction <add>, %4, %cst_12 [1] : vector<8x32xf32> to vector<8xf32>
    %19 = vector.shape_cast %18 : vector<8xf32> to vector<8x1xf32>
    %cst_13 = arith.constant 3.200000e+01 : f32
    %20 = vector.broadcast %cst_13 : f32 to vector<8x1xf32>
    %21 = arith.divf %19, %20 : vector<8x1xf32>
    %22 = vector.broadcast %21 : vector<8x1xf32> to vector<8x32xf32>
    %23 = arith.subf %4, %22 : vector<8x32xf32>
    %24 = arith.mulf %23, %23 : vector<8x32xf32>
    %cst_14 = arith.constant dense<0.000000e+00> : vector<8xf32>
    %25 = vector.multi_reduction <add>, %24, %cst_14 [1] : vector<8x32xf32> to vector<8xf32>
    %26 = vector.shape_cast %25 : vector<8xf32> to vector<8x1xf32>
    %cst_15 = arith.constant 3.200000e+01 : f32
    %27 = vector.broadcast %cst_15 : f32 to vector<8x1xf32>
    %28 = arith.divf %26, %27 : vector<8x1xf32>
    %29 = vector.broadcast %21 : vector<8x1xf32> to vector<8x32xf32>
    %30 = arith.subf %4, %29 : vector<8x32xf32>
    %cst_16 = arith.constant 9.99999974E-6 : f32
    %31 = vector.broadcast %cst_16 : f32 to vector<8x1xf32>
    %32 = arith.addf %28, %31 : vector<8x1xf32>
    %33 = math.rsqrt %32 : vector<8x1xf32>
    %34 = vector.broadcast %33 : vector<8x1xf32> to vector<8x32xf32>
    %35 = arith.mulf %30, %34 : vector<8x32xf32>
    %36 = vector.broadcast %15 : vector<1x32xf32> to vector<8x32xf32>
    %37 = arith.mulf %35, %36 : vector<8x32xf32>
    %38 = vector.broadcast %17 : vector<1x32xf32> to vector<8x32xf32>
    %39 = arith.addf %37, %38 : vector<8x32xf32>
    %40 = arith.truncf %39 : vector<8x32xf32> to vector<8x32xbf16>
    %c0_17 = arith.constant 0 : index
    %c0_18 = arith.constant 0 : index
    %c0_19 = arith.constant 0 : index
    %41 = vector.load %arg6[%c0_17, %c0_18, %c0_19] : memref<1x32x96xbf16, #tpu.memory_space<vmem>>, vector<1x32x96xbf16>
    %42 = vector.shape_cast %41 : vector<1x32x96xbf16> to vector<32x96xbf16>
    %cst_20 = arith.constant dense<0.000000e+00> : vector<8x96xf32>
    %43 = tpu.matmul %40, %42, %cst_20 {dimension_numbers = #tpu.dot_dimension_numbers<[1], [0], [0], [1], [0, 0, 1, 1], [], []>} : vector<8x32xbf16>, vector<32x96xbf16>, vector<8x96xf32> -> vector<8x96xf32>
    %c0_21 = arith.constant 0 : index
    %c0_22 = arith.constant 0 : index
    %c0_23 = arith.constant 0 : index
    %44 = vector.load %arg7[%c0_21, %c0_22, %c0_23] : memref<1x1x96xf32, #tpu.memory_space<vmem>>, vector<1x1x96xf32>
    %45 = vector.shape_cast %44 : vector<1x1x96xf32> to vector<1x96xf32>
    %46 = vector.broadcast %45 : vector<1x96xf32> to vector<8x96xf32>
    %47 = arith.addf %43, %46 : vector<8x96xf32>
    %48 = vector.extract_strided_slice %47 {offsets = [0, 0], sizes = [8, 32], strides = [1, 1]} : vector<8x96xf32> to vector<8x32xf32>
    %49 = arith.truncf %48 : vector<8x32xf32> to vector<8x32xbf16>
    %50 = vector.extract_strided_slice %47 {offsets = [0, 32], sizes = [8, 32], strides = [1, 1]} : vector<8x96xf32> to vector<8x32xf32>
    %51 = arith.truncf %50 : vector<8x32xf32> to vector<8x32xbf16>
    %52 = vector.extract_strided_slice %47 {offsets = [0, 64], sizes = [8, 32], strides = [1, 1]} : vector<8x96xf32> to vector<8x32xf32>
    %53 = arith.truncf %52 : vector<8x32xf32> to vector<8x32xbf16>
    %c0_24 = arith.constant 0 : index
    %c0_25 = arith.constant 0 : index
    %c0_26 = arith.constant 0 : index
    %c0_27 = arith.constant 0 : index
    %54 = vector.load %arg19[%c0_24, %c0_25, %c0_26, %c0_27] : memref<1x1x8x32xbf16, #tpu.memory_space<vmem>>, vector<1x1x8x32xbf16>
    %55 = vector.shape_cast %54 : vector<1x1x8x32xbf16> to vector<8x32xbf16>
    %56 = vector.shape_cast %51 : vector<8x32xbf16> to vector<1x1x8x32xbf16>
    tpu.vector_store %arg19[%c0_24, %c0_25, %c0_26, %c0_27], %56 {strides = array<i32>} : memref<1x1x8x32xbf16, #tpu.memory_space<vmem>>, vector<1x1x8x32xbf16>,
    %c0_28 = arith.constant 0 : index
    %c0_29 = arith.constant 0 : index
    %c0_30 = arith.constant 0 : index
    %c0_31 = arith.constant 0 : index
    %57 = vector.load %arg20[%c0_28, %c0_29, %c0_30, %c0_31] : memref<1x1x8x32xbf16, #tpu.memory_space<vmem>>, vector<1x1x8x32xbf16>
    %58 = vector.shape_cast %57 : vector<1x1x8x32xbf16> to vector<8x32xbf16>
    %59 = vector.shape_cast %53 : vector<8x32xbf16> to vector<1x1x8x32xbf16>
    tpu.vector_store %arg20[%c0_28, %c0_29, %c0_30, %c0_31], %59 {strides = array<i32>} : memref<1x1x8x32xbf16, #tpu.memory_space<vmem>>, vector<1x1x8x32xbf16>,
    %60 = vector.extract_strided_slice %49 {offsets = [0, 0], sizes = [8, 8], strides = [1, 1]} : vector<8x32xbf16> to vector<8x8xbf16>
    %61 = vector.extract_strided_slice %51 {offsets = [0, 0], sizes = [8, 8], strides = [1, 1]} : vector<8x32xbf16> to vector<8x8xbf16>
    %62 = vector.extract_strided_slice %53 {offsets = [0, 0], sizes = [8, 8], strides = [1, 1]} : vector<8x32xbf16> to vector<8x8xbf16>
    %cst_32 = arith.constant dense<0.000000e+00> : vector<8x8xf32>
    %63 = tpu.matmul %60, %61, %cst_32 {dimension_numbers = #tpu.dot_dimension_numbers<[1], [1], [0], [0], [0, 0, 1, 0], [], []>} : vector<8x8xbf16>, vector<8x8xbf16>, vector<8x8xf32> -> vector<8x8xf32>
    %cst_33 = arith.constant -1.000000e+09 : f32
    %64 = vector.broadcast %cst_33 : f32 to vector<8x8xf32>
    %65 = arith.select %13, %64, %63 : vector<8x8xi1>, vector<8x8xf32>
    %cst_34 = arith.constant dense<0xFF800000> : vector<8xf32>
    %66 = vector.multi_reduction <maximumf>, %65, %cst_34 [1] : vector<8x8xf32> to vector<8xf32>
    %67 = vector.shape_cast %66 : vector<8xf32> to vector<8x1xf32>
    %68 = vector.broadcast %67 : vector<8x1xf32> to vector<8x8xf32>
    %69 = arith.subf %65, %68 : vector<8x8xf32>
    %70 = math.exp %69 : vector<8x8xf32>
    %cst_35 = arith.constant dense<0.000000e+00> : vector<8xf32>
    %71 = vector.multi_reduction <add>, %70, %cst_35 [1] : vector<8x8xf32> to vector<8xf32>
    %72 = vector.shape_cast %71 : vector<8xf32> to vector<8x1xf32>
    %73 = tpu.reciprocal %72 {approx = true} : vector<8x1xf32> -> vector<8x1xf32>
    %74 = vector.broadcast %73 : vector<8x1xf32> to vector<8x8xf32>
    %75 = arith.mulf %70, %74 : vector<8x8xf32>
    %76 = arith.truncf %75 : vector<8x8xf32> to vector<8x8xbf16>
    %cst_36 = arith.constant dense<0.000000e+00> : vector<8x8xf32>
    %77 = tpu.matmul %76, %62, %cst_36 {dimension_numbers = #tpu.dot_dimension_numbers<[1], [0], [0], [1], [0, 0, 1, 1], [], []>} : vector<8x8xbf16>, vector<8x8xbf16>, vector<8x8xf32> -> vector<8x8xf32>
    %78 = arith.truncf %77 : vector<8x8xf32> to vector<8x8xbf16>
    %c0_37 = arith.constant 0 : index
    %c0_38 = arith.constant 0 : index
    %79 = vector.load %arg21[%c0_37, %c0_38] : memref<8x32xbf16, #tpu.memory_space<vmem>>, vector<8x8xbf16>
    tpu.vector_store %arg21[%c0_37, %c0_38], %78 {strides = array<i32>} : memref<8x32xbf16, #tpu.memory_space<vmem>>, vector<8x8xbf16>,
    %80 = vector.extract_strided_slice %49 {offsets = [0, 8], sizes = [8, 8], strides = [1, 1]} : vector<8x32xbf16> to vector<8x8xbf16>
    %81 = vector.extract_strided_slice %51 {offsets = [0, 8], sizes = [8, 8], strides = [1, 1]} : vector<8x32xbf16> to vector<8x8xbf16>
    %82 = vector.extract_strided_slice %53 {offsets = [0, 8], sizes = [8, 8], strides = [1, 1]} : vector<8x32xbf16> to vector<8x8xbf16>
    %cst_39 = arith.constant dense<0.000000e+00> : vector<8x8xf32>
    %83 = tpu.matmul %80, %81, %cst_39 {dimension_numbers = #tpu.dot_dimension_numbers<[1], [1], [0], [0], [0, 0, 1, 0], [], []>} : vector<8x8xbf16>, vector<8x8xbf16>, vector<8x8xf32> -> vector<8x8xf32>
    %cst_40 = arith.constant -1.000000e+09 : f32
    %84 = vector.broadcast %cst_40 : f32 to vector<8x8xf32>
    %85 = arith.select %13, %84, %83 : vector<8x8xi1>, vector<8x8xf32>
    %cst_41 = arith.constant dense<0xFF800000> : vector<8xf32>
    %86 = vector.multi_reduction <maximumf>, %85, %cst_41 [1] : vector<8x8xf32> to vector<8xf32>
    %87 = vector.shape_cast %86 : vector<8xf32> to vector<8x1xf32>
    %88 = vector.broadcast %87 : vector<8x1xf32> to vector<8x8xf32>
    %89 = arith.subf %85, %88 : vector<8x8xf32>
    %90 = math.exp %89 : vector<8x8xf32>
    %cst_42 = arith.constant dense<0.000000e+00> : vector<8xf32>
    %91 = vector.multi_reduction <add>, %90, %cst_42 [1] : vector<8x8xf32> to vector<8xf32>
    %92 = vector.shape_cast %91 : vector<8xf32> to vector<8x1xf32>
    %93 = tpu.reciprocal %92 {approx = true} : vector<8x1xf32> -> vector<8x1xf32>
    %94 = vector.broadcast %93 : vector<8x1xf32> to vector<8x8xf32>
    %95 = arith.mulf %90, %94 : vector<8x8xf32>
    %96 = arith.truncf %95 : vector<8x8xf32> to vector<8x8xbf16>
    %cst_43 = arith.constant dense<0.000000e+00> : vector<8x8xf32>
    %97 = tpu.matmul %96, %82, %cst_43 {dimension_numbers = #tpu.dot_dimension_numbers<[1], [0], [0], [1], [0, 0, 1, 1], [], []>} : vector<8x8xbf16>, vector<8x8xbf16>, vector<8x8xf32> -> vector<8x8xf32>
    %98 = arith.truncf %97 : vector<8x8xf32> to vector<8x8xbf16>
    %c0_44 = arith.constant 0 : index
    %c8 = arith.constant 8 : index
    %99 = vector.load %arg21[%c0_44, %c8] : memref<8x32xbf16, #tpu.memory_space<vmem>>, vector<8x8xbf16>
    tpu.vector_store %arg21[%c0_44, %c8], %98 {strides = array<i32>} : memref<8x32xbf16, #tpu.memory_space<vmem>>, vector<8x8xbf16>,
    %100 = vector.extract_strided_slice %49 {offsets = [0, 16], sizes = [8, 8], strides = [1, 1]} : vector<8x32xbf16> to vector<8x8xbf16>
    %101 = vector.extract_strided_slice %51 {offsets = [0, 16], sizes = [8, 8], strides = [1, 1]} : vector<8x32xbf16> to vector<8x8xbf16>
    %102 = vector.extract_strided_slice %53 {offsets = [0, 16], sizes = [8, 8], strides = [1, 1]} : vector<8x32xbf16> to vector<8x8xbf16>
    %cst_45 = arith.constant dense<0.000000e+00> : vector<8x8xf32>
    %103 = tpu.matmul %100, %101, %cst_45 {dimension_numbers = #tpu.dot_dimension_numbers<[1], [1], [0], [0], [0, 0, 1, 0], [], []>} : vector<8x8xbf16>, vector<8x8xbf16>, vector<8x8xf32> -> vector<8x8xf32>
    %cst_46 = arith.constant -1.000000e+09 : f32
    %104 = vector.broadcast %cst_46 : f32 to vector<8x8xf32>
    %105 = arith.select %13, %104, %103 : vector<8x8xi1>, vector<8x8xf32>
    %cst_47 = arith.constant dense<0xFF800000> : vector<8xf32>
    %106 = vector.multi_reduction <maximumf>, %105, %cst_47 [1] : vector<8x8xf32> to vector<8xf32>
    %107 = vector.shape_cast %106 : vector<8xf32> to vector<8x1xf32>
    %108 = vector.broadcast %107 : vector<8x1xf32> to vector<8x8xf32>
    %109 = arith.subf %105, %108 : vector<8x8xf32>
    %110 = math.exp %109 : vector<8x8xf32>
    %cst_48 = arith.constant dense<0.000000e+00> : vector<8xf32>
    %111 = vector.multi_reduction <add>, %110, %cst_48 [1] : vector<8x8xf32> to vector<8xf32>
    %112 = vector.shape_cast %111 : vector<8xf32> to vector<8x1xf32>
    %113 = tpu.reciprocal %112 {approx = true} : vector<8x1xf32> -> vector<8x1xf32>
    %114 = vector.broadcast %113 : vector<8x1xf32> to vector<8x8xf32>
    %115 = arith.mulf %110, %114 : vector<8x8xf32>
    %116 = arith.truncf %115 : vector<8x8xf32> to vector<8x8xbf16>
    %cst_49 = arith.constant dense<0.000000e+00> : vector<8x8xf32>
    %117 = tpu.matmul %116, %102, %cst_49 {dimension_numbers = #tpu.dot_dimension_numbers<[1], [0], [0], [1], [0, 0, 1, 1], [], []>} : vector<8x8xbf16>, vector<8x8xbf16>, vector<8x8xf32> -> vector<8x8xf32>
    %118 = arith.truncf %117 : vector<8x8xf32> to vector<8x8xbf16>
    %c0_50 = arith.constant 0 : index
    %c16 = arith.constant 16 : index
    %119 = vector.load %arg21[%c0_50, %c16] : memref<8x32xbf16, #tpu.memory_space<vmem>>, vector<8x8xbf16>
    tpu.vector_store %arg21[%c0_50, %c16], %118 {strides = array<i32>} : memref<8x32xbf16, #tpu.memory_space<vmem>>, vector<8x8xbf16>,
    %120 = vector.extract_strided_slice %49 {offsets = [0, 24], sizes = [8, 8], strides = [1, 1]} : vector<8x32xbf16> to vector<8x8xbf16>
    %121 = vector.extract_strided_slice %51 {offsets = [0, 24], sizes = [8, 8], strides = [1, 1]} : vector<8x32xbf16> to vector<8x8xbf16>
    %122 = vector.extract_strided_slice %53 {offsets = [0, 24], sizes = [8, 8], strides = [1, 1]} : vector<8x32xbf16> to vector<8x8xbf16>
    %cst_51 = arith.constant dense<0.000000e+00> : vector<8x8xf32>
    %123 = tpu.matmul %120, %121, %cst_51 {dimension_numbers = #tpu.dot_dimension_numbers<[1], [1], [0], [0], [0, 0, 1, 0], [], []>} : vector<8x8xbf16>, vector<8x8xbf16>, vector<8x8xf32> -> vector<8x8xf32>
    %cst_52 = arith.constant -1.000000e+09 : f32
    %124 = vector.broadcast %cst_52 : f32 to vector<8x8xf32>
    %125 = arith.select %13, %124, %123 : vector<8x8xi1>, vector<8x8xf32>
    %cst_53 = arith.constant dense<0xFF800000> : vector<8xf32>
    %126 = vector.multi_reduction <maximumf>, %125, %cst_53 [1] : vector<8x8xf32> to vector<8xf32>
    %127 = vector.shape_cast %126 : vector<8xf32> to vector<8x1xf32>
    %128 = vector.broadcast %127 : vector<8x1xf32> to vector<8x8xf32>
    %129 = arith.subf %125, %128 : vector<8x8xf32>
    %130 = math.exp %129 : vector<8x8xf32>
    %cst_54 = arith.constant dense<0.000000e+00> : vector<8xf32>
    %131 = vector.multi_reduction <add>, %130, %cst_54 [1] : vector<8x8xf32> to vector<8xf32>
    %132 = vector.shape_cast %131 : vector<8xf32> to vector<8x1xf32>
    %133 = tpu.reciprocal %132 {approx = true} : vector<8x1xf32> -> vector<8x1xf32>
    %134 = vector.broadcast %133 : vector<8x1xf32> to vector<8x8xf32>
    %135 = arith.mulf %130, %134 : vector<8x8xf32>
    %136 = arith.truncf %135 : vector<8x8xf32> to vector<8x8xbf16>
    %cst_55 = arith.constant dense<0.000000e+00> : vector<8x8xf32>
    %137 = tpu.matmul %136, %122, %cst_55 {dimension_numbers = #tpu.dot_dimension_numbers<[1], [0], [0], [1], [0, 0, 1, 1], [], []>} : vector<8x8xbf16>, vector<8x8xbf16>, vector<8x8xf32> -> vector<8x8xf32>
    %138 = arith.truncf %137 : vector<8x8xf32> to vector<8x8xbf16>
    %c0_56 = arith.constant 0 : index
    %c24 = arith.constant 24 : index
    %139 = vector.load %arg21[%c0_56, %c24] : memref<8x32xbf16, #tpu.memory_space<vmem>>, vector<8x8xbf16>
    tpu.vector_store %arg21[%c0_56, %c24], %138 {strides = array<i32>} : memref<8x32xbf16, #tpu.memory_space<vmem>>, vector<8x8xbf16>,
    %c0_57 = arith.constant 0 : index
    %c0_58 = arith.constant 0 : index
    %140 = vector.load %arg21[%c0_57, %c0_58] : memref<8x32xbf16, #tpu.memory_space<vmem>>, vector<8x32xbf16>
    %c0_59 = arith.constant 0 : index
    %c0_60 = arith.constant 0 : index
    %c0_61 = arith.constant 0 : index
    %141 = vector.load %arg8[%c0_59, %c0_60, %c0_61] : memref<1x32x32xbf16, #tpu.memory_space<vmem>>, vector<1x32x32xbf16>
    %142 = vector.shape_cast %141 : vector<1x32x32xbf16> to vector<32x32xbf16>
    %cst_62 = arith.constant dense<0.000000e+00> : vector<8x32xf32>
    %143 = tpu.matmul %140, %142, %cst_62 {dimension_numbers = #tpu.dot_dimension_numbers<[1], [0], [0], [1], [0, 0, 1, 1], [], []>} : vector<8x32xbf16>, vector<32x32xbf16>, vector<8x32xf32> -> vector<8x32xf32>
    %c0_63 = arith.constant 0 : index
    %c0_64 = arith.constant 0 : index
    %c0_65 = arith.constant 0 : index
    %144 = vector.load %arg9[%c0_63, %c0_64, %c0_65] : memref<1x1x32xf32, #tpu.memory_space<vmem>>, vector<1x1x32xf32>
    %145 = vector.shape_cast %144 : vector<1x1x32xf32> to vector<1x32xf32>
    %146 = vector.broadcast %145 : vector<1x32xf32> to vector<8x32xf32>
    %147 = arith.addf %143, %146 : vector<8x32xf32>
    %148 = arith.addf %4, %147 : vector<8x32xf32>
    %c0_66 = arith.constant 0 : index
    %c0_67 = arith.constant 0 : index
    %c0_68 = arith.constant 0 : index
    %149 = vector.load %arg10[%c0_66, %c0_67, %c0_68] : memref<1x1x32xf32, #tpu.memory_space<vmem>>, vector<1x1x32xf32>
    %150 = vector.shape_cast %149 : vector<1x1x32xf32> to vector<1x32xf32>
    %c0_69 = arith.constant 0 : index
    %c0_70 = arith.constant 0 : index
    %c0_71 = arith.constant 0 : index
    %151 = vector.load %arg11[%c0_69, %c0_70, %c0_71] : memref<1x1x32xf32, #tpu.memory_space<vmem>>, vector<1x1x32xf32>
    %152 = vector.shape_cast %151 : vector<1x1x32xf32> to vector<1x32xf32>
    %cst_72 = arith.constant dense<0.000000e+00> : vector<8xf32>
    %153 = vector.multi_reduction <add>, %148, %cst_72 [1] : vector<8x32xf32> to vector<8xf32>
    %154 = vector.shape_cast %153 : vector<8xf32> to vector<8x1xf32>
    %cst_73 = arith.constant 3.200000e+01 : f32
    %155 = vector.broadcast %cst_73 : f32 to vector<8x1xf32>
    %156 = arith.divf %154, %155 : vector<8x1xf32>
    %157 = vector.broadcast %156 : vector<8x1xf32> to vector<8x32xf32>
    %158 = arith.subf %148, %157 : vector<8x32xf32>
    %159 = arith.mulf %158, %158 : vector<8x32xf32>
    %cst_74 = arith.constant dense<0.000000e+00> : vector<8xf32>
    %160 = vector.multi_reduction <add>, %159, %cst_74 [1] : vector<8x32xf32> to vector<8xf32>
    %161 = vector.shape_cast %160 : vector<8xf32> to vector<8x1xf32>
    %cst_75 = arith.constant 3.200000e+01 : f32
    %162 = vector.broadcast %cst_75 : f32 to vector<8x1xf32>
    %163 = arith.divf %161, %162 : vector<8x1xf32>
    %164 = vector.broadcast %156 : vector<8x1xf32> to vector<8x32xf32>
    %165 = arith.subf %148, %164 : vector<8x32xf32>
    %cst_76 = arith.constant 9.99999974E-6 : f32
    %166 = vector.broadcast %cst_76 : f32 to vector<8x1xf32>
    %167 = arith.addf %163, %166 : vector<8x1xf32>
    %168 = math.rsqrt %167 : vector<8x1xf32>
    %169 = vector.broadcast %168 : vector<8x1xf32> to vector<8x32xf32>
    %170 = arith.mulf %165, %169 : vector<8x32xf32>
    %171 = vector.broadcast %150 : vector<1x32xf32> to vector<8x32xf32>
    %172 = arith.mulf %170, %171 : vector<8x32xf32>
    %173 = vector.broadcast %152 : vector<1x32xf32> to vector<8x32xf32>
    %174 = arith.addf %172, %173 : vector<8x32xf32>
    %175 = arith.truncf %174 : vector<8x32xf32> to vector<8x32xbf16>
    %cst_77 = arith.constant 0.000000e+00 : f32
    %176 = vector.broadcast %cst_77 : f32 to vector<8x32xf32>
    %c0_78 = arith.constant 0 : index
    %c0_79 = arith.constant 0 : index
    %c0_80 = arith.constant 0 : index
    %177 = vector.load %arg12[%c0_78, %c0_79, %c0_80] : memref<1x32x128xbf16, #tpu.memory_space<vmem>>, vector<1x32x128xbf16>
    %178 = vector.shape_cast %177 : vector<1x32x128xbf16> to vector<32x128xbf16>
    %cst_81 = arith.constant dense<0.000000e+00> : vector<8x128xf32>
    %179 = tpu.matmul %175, %178, %cst_81 {dimension_numbers = #tpu.dot_dimension_numbers<[1], [0], [0], [1], [0, 0, 1, 1], [], []>} : vector<8x32xbf16>, vector<32x128xbf16>, vector<8x128xf32> -> vector<8x128xf32>
    %c0_82 = arith.constant 0 : index
    %c0_83 = arith.constant 0 : index
    %c0_84 = arith.constant 0 : index
    %180 = vector.load %arg13[%c0_82, %c0_83, %c0_84] : memref<1x1x128xf32, #tpu.memory_space<vmem>>, vector<1x1x128xf32>
    %181 = vector.shape_cast %180 : vector<1x1x128xf32> to vector<1x128xf32>
    %182 = vector.broadcast %181 : vector<1x128xf32> to vector<8x128xf32>
    %183 = arith.addf %179, %182 : vector<8x128xf32>
    %cst_85 = arith.constant 0.000000e+00 : f32
    %184 = vector.broadcast %cst_85 : f32 to vector<8x128xf32>
    %185 = arith.subf %184, %183 : vector<8x128xf32>
    %186 = math.exp %185 : vector<8x128xf32>
    %cst_86 = arith.constant 1.000000e+00 : f32
    %187 = vector.broadcast %cst_86 : f32 to vector<8x128xf32>
    %188 = arith.addf %187, %186 : vector<8x128xf32>
    %cst_87 = arith.constant 1.000000e+00 : f32
    %189 = vector.broadcast %cst_87 : f32 to vector<8x128xf32>
    %190 = arith.divf %189, %188 : vector<8x128xf32>
    %191 = arith.mulf %183, %190 : vector<8x128xf32>
    %192 = arith.truncf %191 : vector<8x128xf32> to vector<8x128xbf16>
    %c0_88 = arith.constant 0 : index
    %c0_89 = arith.constant 0 : index
    %c0_90 = arith.constant 0 : index
    %193 = vector.load %arg14[%c0_88, %c0_89, %c0_90] : memref<1x128x32xbf16, #tpu.memory_space<vmem>>, vector<1x128x32xbf16>
    %194 = vector.shape_cast %193 : vector<1x128x32xbf16> to vector<128x32xbf16>
    %cst_91 = arith.constant dense<0.000000e+00> : vector<8x32xf32>
    %195 = tpu.matmul %192, %194, %cst_91 {dimension_numbers = #tpu.dot_dimension_numbers<[1], [0], [0], [1], [0, 0, 1, 1], [], []>} : vector<8x128xbf16>, vector<128x32xbf16>, vector<8x32xf32> -> vector<8x32xf32>
    %196 = arith.addf %176, %195 : vector<8x32xf32>
    %197 = arith.addf %148, %196 : vector<8x32xf32>
    %c0_92 = arith.constant 0 : index
    %c0_93 = arith.constant 0 : index
    %c0_94 = arith.constant 0 : index
    %198 = vector.load %arg15[%c0_92, %c0_93, %c0_94] : memref<1x1x32xf32, #tpu.memory_space<vmem>>, vector<1x1x32xf32>
    %199 = vector.shape_cast %198 : vector<1x1x32xf32> to vector<1x32xf32>
    %200 = vector.broadcast %199 : vector<1x32xf32> to vector<8x32xf32>
    %201 = arith.addf %197, %200 : vector<8x32xf32>
    %c0_95 = arith.constant 0 : index
    %c0_96 = arith.constant 0 : index
    %c0_97 = arith.constant 0 : index
    %202 = vector.load %arg18[%c0_95, %c0_96, %c0_97] : memref<1x8x32xf32, #tpu.memory_space<vmem>>, vector<1x8x32xf32>
    %203 = vector.shape_cast %202 : vector<1x8x32xf32> to vector<8x32xf32>
    %204 = vector.shape_cast %201 : vector<8x32xf32> to vector<1x8x32xf32>
    tpu.vector_store %arg18[%c0_95, %c0_96, %c0_97], %204 {strides = array<i32>} : memref<1x8x32xf32, #tpu.memory_space<vmem>>, vector<1x8x32xf32>,
    %c1_i32 = arith.constant 1 : i32
    %205 = arith.cmpi eq, %arg1, %c1_i32 : i32
    %206 = arith.extui %205 : i1 to i32
    %c0_i32_98 = arith.constant 0 : i32
    %207 = arith.cmpi ne, %206, %c0_i32_98 : i32
    scf.if %207 {
      %c0_99 = arith.constant 0 : index
      %c0_100 = arith.constant 0 : index
      %208 = vector.load %arg16[%c0_99, %c0_100] : memref<1x32xf32, #tpu.memory_space<vmem>>, vector<1x32xf32>
      %c0_101 = arith.constant 0 : index
      %c0_102 = arith.constant 0 : index
      %209 = vector.load %arg17[%c0_101, %c0_102] : memref<1x32xf32, #tpu.memory_space<vmem>>, vector<1x32xf32>
      %cst_103 = arith.constant dense<0.000000e+00> : vector<8xf32>
      %210 = vector.multi_reduction <add>, %201, %cst_103 [1] : vector<8x32xf32> to vector<8xf32>
      %211 = vector.shape_cast %210 : vector<8xf32> to vector<8x1xf32>
      %cst_104 = arith.constant 3.200000e+01 : f32
      %212 = vector.broadcast %cst_104 : f32 to vector<8x1xf32>
      %213 = arith.divf %211, %212 : vector<8x1xf32>
      %214 = vector.broadcast %213 : vector<8x1xf32> to vector<8x32xf32>
      %215 = arith.subf %201, %214 : vector<8x32xf32>
      %216 = arith.mulf %215, %215 : vector<8x32xf32>
      %cst_105 = arith.constant dense<0.000000e+00> : vector<8xf32>
      %217 = vector.multi_reduction <add>, %216, %cst_105 [1] : vector<8x32xf32> to vector<8xf32>
      %218 = vector.shape_cast %217 : vector<8xf32> to vector<8x1xf32>
      %cst_106 = arith.constant 3.200000e+01 : f32
      %219 = vector.broadcast %cst_106 : f32 to vector<8x1xf32>
      %220 = arith.divf %218, %219 : vector<8x1xf32>
      %221 = vector.broadcast %213 : vector<8x1xf32> to vector<8x32xf32>
      %222 = arith.subf %201, %221 : vector<8x32xf32>
      %cst_107 = arith.constant 9.99999974E-6 : f32
      %223 = vector.broadcast %cst_107 : f32 to vector<8x1xf32>
      %224 = arith.addf %220, %223 : vector<8x1xf32>
      %225 = math.rsqrt %224 : vector<8x1xf32>
      %226 = vector.broadcast %225 : vector<8x1xf32> to vector<8x32xf32>
      %227 = arith.mulf %222, %226 : vector<8x32xf32>
      %228 = vector.broadcast %208 : vector<1x32xf32> to vector<8x32xf32>
      %229 = arith.mulf %227, %228 : vector<8x32xf32>
      %230 = vector.broadcast %209 : vector<1x32xf32> to vector<8x32xf32>
      %231 = arith.addf %229, %230 : vector<8x32xf32>
      %c0_108 = arith.constant 0 : index
      %c0_109 = arith.constant 0 : index
      %c0_110 = arith.constant 0 : index
      %232 = vector.load %arg18[%c0_108, %c0_109, %c0_110] : memref<1x8x32xf32, #tpu.memory_space<vmem>>, vector<1x8x32xf32>
      %233 = vector.shape_cast %232 : vector<1x8x32xf32> to vector<8x32xf32>
      %234 = vector.shape_cast %231 : vector<8x32xf32> to vector<1x8x32xf32>
      tpu.vector_store %arg18[%c0_108, %c0_109, %c0_110], %234 {strides = array<i32>} : memref<1x8x32xf32, #tpu.memory_space<vmem>>, vector<1x8x32xf32>,
    } else {
    }
    return
  }
  func.func @transform_0(%arg0: i32, %arg1: i32) -> (i32, i32, i32) {
    %c0_i32 = arith.constant 0 : i32
    %c0_i32_0 = arith.constant 0 : i32
    %c0_i32_1 = arith.constant 0 : i32
    return %arg0, %c0_i32, %c0_i32_0 : i32, i32, i32
  }
  func.func @transform_1(%arg0: i32, %arg1: i32) -> (i32, i32, i32) {
    %c0_i32 = arith.constant 0 : i32
    %c0_i32_0 = arith.constant 0 : i32
    %c0_i32_1 = arith.constant 0 : i32
    return %arg0, %c0_i32, %c0_i32_0 : i32, i32, i32
  }
  func.func @transform_2(%arg0: i32, %arg1: i32) -> (i32, i32, i32) {
    %c0_i32 = arith.constant 0 : i32
    %c0_i32_0 = arith.constant 0 : i32
    %c0_i32_1 = arith.constant 0 : i32
    return %arg1, %c0_i32, %c0_i32_0 : i32, i32, i32
  }
  func.func @transform_3(%arg0: i32, %arg1: i32) -> (i32, i32, i32) {
    %c0_i32 = arith.constant 0 : i32
    %c0_i32_0 = arith.constant 0 : i32
    %c0_i32_1 = arith.constant 0 : i32
    return %arg1, %c0_i32, %c0_i32_0 : i32, i32, i32
  }
  func.func @transform_4(%arg0: i32, %arg1: i32) -> (i32, i32, i32) {
    %c0_i32 = arith.constant 0 : i32
    %c0_i32_0 = arith.constant 0 : i32
    %c0_i32_1 = arith.constant 0 : i32
    return %arg1, %c0_i32, %c0_i32_0 : i32, i32, i32
  }
  func.func @transform_5(%arg0: i32, %arg1: i32) -> (i32, i32, i32) {
    %c0_i32 = arith.constant 0 : i32
    %c0_i32_0 = arith.constant 0 : i32
    %c0_i32_1 = arith.constant 0 : i32
    return %arg1, %c0_i32, %c0_i32_0 : i32, i32, i32
  }
  func.func @transform_6(%arg0: i32, %arg1: i32) -> (i32, i32, i32) {
    %c0_i32 = arith.constant 0 : i32
    %c0_i32_0 = arith.constant 0 : i32
    %c0_i32_1 = arith.constant 0 : i32
    return %arg1, %c0_i32, %c0_i32_0 : i32, i32, i32
  }
  func.func @transform_7(%arg0: i32, %arg1: i32) -> (i32, i32, i32) {
    %c0_i32 = arith.constant 0 : i32
    %c0_i32_0 = arith.constant 0 : i32
    %c0_i32_1 = arith.constant 0 : i32
    return %arg1, %c0_i32, %c0_i32_0 : i32, i32, i32
  }
  func.func @transform_8(%arg0: i32, %arg1: i32) -> (i32, i32, i32) {
    %c0_i32 = arith.constant 0 : i32
    %c0_i32_0 = arith.constant 0 : i32
    %c0_i32_1 = arith.constant 0 : i32
    return %arg1, %c0_i32, %c0_i32_0 : i32, i32, i32
  }
  func.func @transform_9(%arg0: i32, %arg1: i32) -> (i32, i32, i32) {
    %c0_i32 = arith.constant 0 : i32
    %c0_i32_0 = arith.constant 0 : i32
    %c0_i32_1 = arith.constant 0 : i32
    return %arg1, %c0_i32, %c0_i32_0 : i32, i32, i32
  }
  func.func @transform_10(%arg0: i32, %arg1: i32) -> (i32, i32, i32) {
    %c0_i32 = arith.constant 0 : i32
    %c0_i32_0 = arith.constant 0 : i32
    %c0_i32_1 = arith.constant 0 : i32
    return %arg1, %c0_i32, %c0_i32_0 : i32, i32, i32
  }
  func.func @transform_11(%arg0: i32, %arg1: i32) -> (i32, i32, i32) {
    %c0_i32 = arith.constant 0 : i32
    %c0_i32_0 = arith.constant 0 : i32
    %c0_i32_1 = arith.constant 0 : i32
    return %arg1, %c0_i32, %c0_i32_0 : i32, i32, i32
  }
  func.func @transform_12(%arg0: i32, %arg1: i32) -> (i32, i32, i32) {
    %c0_i32 = arith.constant 0 : i32
    %c0_i32_0 = arith.constant 0 : i32
    %c0_i32_1 = arith.constant 0 : i32
    return %arg1, %c0_i32, %c0_i32_0 : i32, i32, i32
  }
  func.func @transform_13(%arg0: i32, %arg1: i32) -> (i32, i32, i32) {
    %c0_i32 = arith.constant 0 : i32
    %c0_i32_0 = arith.constant 0 : i32
    %c0_i32_1 = arith.constant 0 : i32
    return %arg1, %c0_i32, %c0_i32_0 : i32, i32, i32
  }
  func.func @transform_14(%arg0: i32, %arg1: i32) -> (i32, i32) {
    %c0_i32 = arith.constant 0 : i32
    %c0_i32_0 = arith.constant 0 : i32
    %c0_i32_1 = arith.constant 0 : i32
    return %c0_i32, %c0_i32_0 : i32, i32
  }
  func.func @transform_15(%arg0: i32, %arg1: i32) -> (i32, i32) {
    %c0_i32 = arith.constant 0 : i32
    %c0_i32_0 = arith.constant 0 : i32
    %c0_i32_1 = arith.constant 0 : i32
    return %c0_i32, %c0_i32_0 : i32, i32
  }
  func.func @transform_16(%arg0: i32, %arg1: i32) -> (i32, i32, i32) {
    %c0_i32 = arith.constant 0 : i32
    %c0_i32_0 = arith.constant 0 : i32
    %c0_i32_1 = arith.constant 0 : i32
    return %arg0, %c0_i32, %c0_i32_0 : i32, i32, i32
  }
  func.func @transform_17(%arg0: i32, %arg1: i32) -> (i32, i32, i32, i32) {
    %c0_i32 = arith.constant 0 : i32
    %c0_i32_0 = arith.constant 0 : i32
    %c0_i32_1 = arith.constant 0 : i32
    return %arg0, %arg1, %c0_i32, %c0_i32_0 : i32, i32, i32, i32
  }
  func.func @transform_18(%arg0: i32, %arg1: i32) -> (i32, i32, i32, i32) {
    %c0_i32 = arith.constant 0 : i32
    %c0_i32_0 = arith.constant 0 : i32
    %c0_i32_1 = arith.constant 0 : i32
    return %arg0, %arg1, %c0_i32, %c0_i32_0 : i32, i32, i32, i32
  }
}

</mosaic_0001>

<llo_original>
// kernel: tpu_custom_call.1
$region0: #{tpu_custom_call.1}
  #allocation0 [shape = 'u32[]', space=smem, size = 0x4, offset = 0x4, fixed_abs, tag = 'smem constant byte address 0x4 - core index']
  #allocation1 [shape = 'u32[144,128]{1,0:T(1,128)}', space=vmem, size = 0x12000, scoped, tag = 'internal scratch']
  #allocation2 [shape = 'bf16[8,32]{1,0:T(8,128)(2,1)}', space=vmem, size = 0x800, scoped, tag = 'scratch operand']
  %s0 = inlined_call_operand.vmem [shape: f32[2,8,32], index: 0, kind: input, shape index: {}]
  %s1 = inlined_call_operand.vmem [shape: f32[2,1,8], index: 1, kind: input, shape index: {}]
  %s2 = inlined_call_operand.vmem [shape: f32[2,1,32], index: 2, kind: input, shape index: {}]
  %s3 = inlined_call_operand.vmem [shape: f32[2,1,32], index: 3, kind: input, shape index: {}]
  %s4 = inlined_call_operand.vmem [shape: bf16[2,32,96], index: 4, kind: input, shape index: {}]
  %s5 = inlined_call_operand.vmem [shape: f32[2,1,96], index: 5, kind: input, shape index: {}]
  %s6 = inlined_call_operand.vmem [shape: bf16[2,32,32], index: 6, kind: input, shape index: {}]
  %s7 = inlined_call_operand.vmem [shape: f32[2,1,32], index: 7, kind: input, shape index: {}]
  %s8 = inlined_call_operand.vmem [shape: f32[2,1,32], index: 8, kind: input, shape index: {}]
  %s9 = inlined_call_operand.vmem [shape: f32[2,1,32], index: 9, kind: input, shape index: {}]
  %s10 = inlined_call_operand.vmem [shape: bf16[2,32,128], index: 10, kind: input, shape index: {}]
  %s11 = inlined_call_operand.vmem [shape: f32[2,1,128], index: 11, kind: input, shape index: {}]
  %s12 = inlined_call_operand.vmem [shape: bf16[2,128,32], index: 12, kind: input, shape index: {}]
  %s13 = inlined_call_operand.vmem [shape: f32[2,1,32], index: 13, kind: input, shape index: {}]
  %s14 = inlined_call_operand.vmem [shape: f32[1,32], index: 14, kind: input, shape index: {}]
  %s15 = inlined_call_operand.vmem [shape: f32[1,32], index: 15, kind: input, shape index: {}]
  %s16 = inlined_call_operand.hbm [shape: f32[2,8,32], index: 16, kind: output, shape index: {0}]
  %s17 = inlined_call_operand.hbm [shape: bf16[2,2,8,32], index: 17, kind: output, shape index: {1}]
  %s18 = inlined_call_operand.hbm [shape: bf16[2,2,8,32], index: 18, kind: output, shape index: {2}]
  %19 = xla_tuple %s16, %s17, %s18
  %s20 = sld [smem:[#allocation0]]
  $region121: #{tpu_custom_call.1} parent=0
    _
  %s22 = ssub.s32 1, %s20
  %s23 = scalar_select 0, %s22, %s20
  $region1: #{tpu_custom_call.1} parent=0
    #allocation3 [shape = 'u8[8192]{0}', space=vmem, size = 0x2000, scoped, tag = 'output window, operand 0']
    #allocation4 [shape = 's32[2]{0}', space=sflag, size = 0x8, scoped, tag = 'scoped memory for tpu_custom_call.1']
    #allocation5 [shape = 'u8[4096]{0}', space=vmem, size = 0x1000, scoped, tag = 'output window, operand 1']
    #allocation6 [shape = 's32[2]{0}', space=sflag, size = 0x8, scoped, tag = 'scoped memory for tpu_custom_call.1']
    #allocation7 [shape = 'u8[4096]{0}', space=vmem, size = 0x1000, scoped, tag = 'output window, operand 2']
    %24 = vsyncpa [#allocation4], 0
    %s25 = scalar_lea.sflag [#allocation4], 1
    %26 = vsyncpa %s25, 0
    %27 = vsyncpa [#allocation6], 0
    %s28 = scalar_lea.sflag [#allocation6], 1
    %29 = vsyncpa %s28, 0
    loop: start=0, step=1, limit=6
    $region2: #{tpu_custom_call.1} parent=1 // loop_pre_header
      _
    $region3: #{tpu_custom_call.1} parent=1 // loop_header
      %s31 = sphi 0, %s35
      %p32 = scmp.ge.s32.totalorder %s31, 6
      %s38 = sphi 0, %s50
      %s39 = sphi 0, %s46
      %s40 = sphi 0, %s38
      %s41 = sphi 0, %s39
      %s42 = sphi 0, %s40
      %s43 = sphi 0, %s41
      %s53 = sphi 0, %s55
      %s56 = sphi 0, %s53
      %s57 = sphi 0, %s56
      %s73 = sphi 0, %s57
      %s79 = sphi 0, %s81
      %s82 = sphi 0, %s79
      %s83 = sphi 0, %s82
      %s99 = sphi 0, %s83
      %s105 = sphi 0, %s107
      %s108 = sphi 0, %s105
      %s109 = sphi 0, %s108
      %s125 = sphi 0, %s109
      %s131 = sphi 0, %s133
      %s134 = sphi 0, %s131
      %s135 = sphi 0, %s134
      %s151 = sphi 0, %s135
      %s157 = sphi 0, %s159
      %s160 = sphi 0, %s157
      %s161 = sphi 0, %s160
      %s177 = sphi 0, %s161
      %s183 = sphi 0, %s185
      %s186 = sphi 0, %s183
      %s187 = sphi 0, %s186
      %s203 = sphi 0, %s187
      %s209 = sphi 0, %s211
      %s212 = sphi 0, %s209
      %s213 = sphi 0, %s212
      %s229 = sphi 0, %s213
      %s235 = sphi 0, %s237
      %s238 = sphi 0, %s235
      %s239 = sphi 0, %s238
      %s255 = sphi 0, %s239
      %s261 = sphi 0, %s263
      %s264 = sphi 0, %s261
      %s265 = sphi 0, %s264
      %s281 = sphi 0, %s265
      %s287 = sphi 0, %s289
      %s290 = sphi 0, %s287
      %s291 = sphi 0, %s290
      %s307 = sphi 0, %s291
      %s313 = sphi 0, %s315
      %s316 = sphi 0, %s313
      %s317 = sphi 0, %s316
      %s333 = sphi 0, %s317
      %s339 = sphi 0, %s341
      %s342 = sphi 0, %s339
      %s343 = sphi 0, %s342
      %s359 = sphi 0, %s343
      %s365 = sphi 0, %s367
      %s368 = sphi 0, %s365
      %s369 = sphi 0, %s368
      %s385 = sphi 0, %s369
      %s391 = sphi 0, %s393
      %s394 = sphi 0, %s391
      %s395 = sphi 0, %s394
      %s411 = sphi 0, %s395
      %s415 = sphi 0, %s415
      %s417 = sphi 0, %s415
      %s418 = sphi 0, %s417
      %s432 = sphi 0, %s418
      %s436 = sphi 0, %s436
      %s438 = sphi 0, %s436
      %s439 = sphi 0, %s438
      %s453 = sphi 0, %s439
      %s459 = sphi 0, %s461
      %s462 = sphi 0, %s459
      %s463 = sphi 0, %s462
      %s479 = sphi 0, %s463
      %s487 = sphi 0, %s489
      %s490 = sphi 0, %s487
      %s491 = sphi 0, %s490
      %s507 = sphi 0, %s491
      %s515 = sphi 0, %s517
      %s518 = sphi 0, %s515
      %s519 = sphi 0, %s518
      %s535 = sphi 0, %s519
    $region4: #{tpu_custom_call.1} parent=1 // loop_header_branch
      %34 = sbr.rel (%p32) target = $region8
    $region5: #{tpu_custom_call.1} parent=1 // loop_body
      %s36 = ssub.s32 %s31, 1
      %s37 = ssub.s32 %s31, 2
      %s44 = sadd.s32 1, %s39
      %p45 = scmp.ge.s32.totalorder %s44, 2
      %s46 = scalar_select %p45, 0, %s44
      %s47 = sadd.s32 1, %s38
      %s48 = scalar_select %p45, %s47, %s38
      %p49 = scmp.ge.s32.totalorder %s48, 2
      %s50 = scalar_select %p49, 0, %s48
      %s51 = ssub.s32 %s38, %s50
      %p52 = scmp.eq.s32.totalorder %s51, 0
      %s54 = sadd.s32 %s53, 1
      %s55 = scalar_select %p52, %s53, %s54
      %p58 = pneg %p52
      %p59 = scmp.eq.s32.totalorder %s31, 3
      %p60 = por %p58, %p59
      %p61 = scmp.ne.s32.totalorder %s53, %s56
      %p62 = scmp.eq.s32.totalorder %s31, 0
      %p63 = por %p61, %p62
      %p64 = scmp.ne.s32.totalorder %s53, %s56
      %p65 = scmp.eq.s32.totalorder %s36, 3
      %p66 = por %p64, %p65
      %p67 = scmp.ne.s32.totalorder %s56, %s57
      %p68 = scmp.eq.s32.totalorder %s36, 0
      %p69 = por %p67, %p68
      %p70 = scmp.ne.s32.totalorder %s56, %s57
      %p71 = scmp.eq.s32.totalorder %s37, 3
      %p72 = por %p70, %p71
      %p74 = scmp.ne.s32.totalorder %s57, %s73
      %p75 = scmp.eq.s32.totalorder %s37, 0
      %p76 = por %p74, %p75
      %s77 = ssub.s32 %s38, %s50
      %p78 = scmp.eq.s32.totalorder %s77, 0
      %s80 = sadd.s32 %s79, 1
      %s81 = scalar_select %p78, %s79, %s80
      %p84 = pneg %p78
      %p85 = scmp.eq.s32.totalorder %s31, 3
      %p86 = por %p84, %p85
      %p87 = scmp.ne.s32.totalorder %s79, %s82
      %p88 = scmp.eq.s32.totalorder %s31, 0
      %p89 = por %p87, %p88
      %p90 = scmp.ne.s32.totalorder %s79, %s82
      %p91 = scmp.eq.s32.totalorder %s36, 3
      %p92 = por %p90, %p91
      %p93 = scmp.ne.s32.totalorder %s82, %s83
      %p94 = scmp.eq.s32.totalorder %s36, 0
      %p95 = por %p93, %p94
      %p96 = scmp.ne.s32.totalorder %s82, %s83
      %p97 = scmp.eq.s32.totalorder %s37, 3
      %p98 = por %p96, %p97
      %p100 = scmp.ne.s32.totalorder %s83, %s99
      %p101 = scmp.eq.s32.totalorder %s37, 0
      %p102 = por %p100, %p101
      %s103 = ssub.s32 %s39, %s46
      %p104 = scmp.eq.s32.totalorder %s103, 0
      %s106 = sadd.s32 %s105, 1
      %s107 = scalar_select %p104, %s105, %s106
      %p110 = pneg %p104
      %p111 = scmp.eq.s32.totalorder %s31, 3
      %p112 = por %p110, %p111
      %p113 = scmp.ne.s32.totalorder %s105, %s108
      %p114 = scmp.eq.s32.totalorder %s31, 0
      %p115 = por %p113, %p114
      %p116 = scmp.ne.s32.totalorder %s105, %s108
      %p117 = scmp.eq.s32.totalorder %s36, 3
      %p118 = por %p116, %p117
      %p119 = scmp.ne.s32.totalorder %s108, %s109
      %p120 = scmp.eq.s32.totalorder %s36, 0
      %p121 = por %p119, %p120
      %p122 = scmp.ne.s32.totalorder %s108, %s109
      %p123 = scmp.eq.s32.totalorder %s37, 3
      %p124 = por %p122, %p123
      %p126 = scmp.ne.s32.totalorder %s109, %s125
      %p127 = scmp.eq.s32.totalorder %s37, 0
      %p128 = por %p126, %p127
      %s129 = ssub.s32 %s39, %s46
      %p130 = scmp.eq.s32.totalorder %s129, 0
      %s132 = sadd.s32 %s131, 1
      %s133 = scalar_select %p130, %s131, %s132
      %p136 = pneg %p130
      %p137 = scmp.eq.s32.totalorder %s31, 3
      %p138 = por %p136, %p137
      %p139 = scmp.ne.s32.totalorder %s131, %s134
      %p140 = scmp.eq.s32.totalorder %s31, 0
      %p141 = por %p139, %p140
      %p142 = scmp.ne.s32.totalorder %s131, %s134
      %p143 = scmp.eq.s32.totalorder %s36, 3
      %p144 = por %p142, %p143
      %p145 = scmp.ne.s32.totalorder %s134, %s135
      %p146 = scmp.eq.s32.totalorder %s36, 0
      %p147 = por %p145, %p146
      %p148 = scmp.ne.s32.totalorder %s134, %s135
      %p149 = scmp.eq.s32.totalorder %s37, 3
      %p150 = por %p148, %p149
      %p152 = scmp.ne.s32.totalorder %s135, %s151
      %p153 = scmp.eq.s32.totalorder %s37, 0
      %p154 = por %p152, %p153
      %s155 = ssub.s32 %s39, %s46
      %p156 = scmp.eq.s32.totalorder %s155, 0
      %s158 = sadd.s32 %s157, 1
      %s159 = scalar_select %p156, %s157, %s158
      %p162 = pneg %p156
      %p163 = scmp.eq.s32.totalorder %s31, 3
      %p164 = por %p162, %p163
      %p165 = scmp.ne.s32.totalorder %s157, %s160
      %p166 = scmp.eq.s32.totalorder %s31, 0
      %p167 = por %p165, %p166
      %p168 = scmp.ne.s32.totalorder %s157, %s160
      %p169 = scmp.eq.s32.totalorder %s36, 3
      %p170 = por %p168, %p169
      %p171 = scmp.ne.s32.totalorder %s160, %s161
      %p172 = scmp.eq.s32.totalorder %s36, 0
      %p173 = por %p171, %p172
      %p174 = scmp.ne.s32.totalorder %s160, %s161
      %p175 = scmp.eq.s32.totalorder %s37, 3
      %p176 = por %p174, %p175
      %p178 = scmp.ne.s32.totalorder %s161, %s177
      %p179 = scmp.eq.s32.totalorder %s37, 0
      %p180 = por %p178, %p179
      %s181 = ssub.s32 %s39, %s46
      %p182 = scmp.eq.s32.totalorder %s181, 0
      %s184 = sadd.s32 %s183, 1
      %s185 = scalar_select %p182, %s183, %s184
      %p188 = pneg %p182
      %p189 = scmp.eq.s32.totalorder %s31, 3
      %p190 = por %p188, %p189
      %p191 = scmp.ne.s32.totalorder %s183, %s186
      %p192 = scmp.eq.s32.totalorder %s31, 0
      %p193 = por %p191, %p192
      %p194 = scmp.ne.s32.totalorder %s183, %s186
      %p195 = scmp.eq.s32.totalorder %s36, 3
      %p196 = por %p194, %p195
      %p197 = scmp.ne.s32.totalorder %s186, %s187
      %p198 = scmp.eq.s32.totalorder %s36, 0
      %p199 = por %p197, %p198
      %p200 = scmp.ne.s32.totalorder %s186, %s187
      %p201 = scmp.eq.s32.totalorder %s37, 3
      %p202 = por %p200, %p201
      %p204 = scmp.ne.s32.totalorder %s187, %s203
      %p205 = scmp.eq.s32.totalorder %s37, 0
      %p206 = por %p204, %p205
      %s207 = ssub.s32 %s39, %s46
      %p208 = scmp.eq.s32.totalorder %s207, 0
      %s210 = sadd.s32 %s209, 1
      %s211 = scalar_select %p208, %s209, %s210
      %p214 = pneg %p208
      %p215 = scmp.eq.s32.totalorder %s31, 3
      %p216 = por %p214, %p215
      %p217 = scmp.ne.s32.totalorder %s209, %s212
      %p218 = scmp.eq.s32.totalorder %s31, 0
      %p219 = por %p217, %p218
      %p220 = scmp.ne.s32.totalorder %s209, %s212
      %p221 = scmp.eq.s32.totalorder %s36, 3
      %p222 = por %p220, %p221
      %p223 = scmp.ne.s32.totalorder %s212, %s213
      %p224 = scmp.eq.s32.totalorder %s36, 0
      %p225 = por %p223, %p224
      %p226 = scmp.ne.s32.totalorder %s212, %s213
      %p227 = scmp.eq.s32.totalorder %s37, 3
      %p228 = por %p226, %p227
      %p230 = scmp.ne.s32.totalorder %s213, %s229
      %p231 = scmp.eq.s32.totalorder %s37, 0
      %p232 = por %p230, %p231
      %s233 = ssub.s32 %s39, %s46
      %p234 = scmp.eq.s32.totalorder %s233, 0
      %s236 = sadd.s32 %s235, 1
      %s237 = scalar_select %p234, %s235, %s236
      %p240 = pneg %p234
      %p241 = scmp.eq.s32.totalorder %s31, 3
      %p242 = por %p240, %p241
      %p243 = scmp.ne.s32.totalorder %s235, %s238
      %p244 = scmp.eq.s32.totalorder %s31, 0
      %p245 = por %p243, %p244
      %p246 = scmp.ne.s32.totalorder %s235, %s238
      %p247 = scmp.eq.s32.totalorder %s36, 3
      %p248 = por %p246, %p247
      %p249 = scmp.ne.s32.totalorder %s238, %s239
      %p250 = scmp.eq.s32.totalorder %s36, 0
      %p251 = por %p249, %p250
      %p252 = scmp.ne.s32.totalorder %s238, %s239
      %p253 = scmp.eq.s32.totalorder %s37, 3
      %p254 = por %p252, %p253
      %p256 = scmp.ne.s32.totalorder %s239, %s255
      %p257 = scmp.eq.s32.totalorder %s37, 0
      %p258 = por %p256, %p257
      %s259 = ssub.s32 %s39, %s46
      %p260 = scmp.eq.s32.totalorder %s259, 0
      %s262 = sadd.s32 %s261, 1
      %s263 = scalar_select %p260, %s261, %s262
      %p266 = pneg %p260
      %p267 = scmp.eq.s32.totalorder %s31, 3
      %p268 = por %p266, %p267
      %p269 = scmp.ne.s32.totalorder %s261, %s264
      %p270 = scmp.eq.s32.totalorder %s31, 0
      %p271 = por %p269, %p270
      %p272 = scmp.ne.s32.totalorder %s261, %s264
      %p273 = scmp.eq.s32.totalorder %s36, 3
      %p274 = por %p272, %p273
      %p275 = scmp.ne.s32.totalorder %s264, %s265
      %p276 = scmp.eq.s32.totalorder %s36, 0
      %p277 = por %p275, %p276
      %p278 = scmp.ne.s32.totalorder %s264, %s265
      %p279 = scmp.eq.s32.totalorder %s37, 3
      %p280 = por %p278, %p279
      %p282 = scmp.ne.s32.totalorder %s265, %s281
      %p283 = scmp.eq.s32.totalorder %s37, 0
      %p284 = por %p282, %p283
      %s285 = ssub.s32 %s39, %s46
      %p286 = scmp.eq.s32.totalorder %s285, 0
      %s288 = sadd.s32 %s287, 1
      %s289 = scalar_select %p286, %s287, %s288
      %p292 = pneg %p286
      %p293 = scmp.eq.s32.totalorder %s31, 3
      %p294 = por %p292, %p293
      %p295 = scmp.ne.s32.totalorder %s287, %s290
      %p296 = scmp.eq.s32.totalorder %s31, 0
      %p297 = por %p295, %p296
      %p298 = scmp.ne.s32.totalorder %s287, %s290
      %p299 = scmp.eq.s32.totalorder %s36, 3
      %p300 = por %p298, %p299
      %p301 = scmp.ne.s32.totalorder %s290, %s291
      %p302 = scmp.eq.s32.totalorder %s36, 0
      %p303 = por %p301, %p302
      %p304 = scmp.ne.s32.totalorder %s290, %s291
      %p305 = scmp.eq.s32.totalorder %s37, 3
      %p306 = por %p304, %p305
      %p308 = scmp.ne.s32.totalorder %s291, %s307
      %p309 = scmp.eq.s32.totalorder %s37, 0
      %p310 = por %p308, %p309
      %s311 = ssub.s32 %s39, %s46
      %p312 = scmp.eq.s32.totalorder %s311, 0
      %s314 = sadd.s32 %s313, 1
      %s315 = scalar_select %p312, %s313, %s314
      %p318 = pneg %p312
      %p319 = scmp.eq.s32.totalorder %s31, 3
      %p320 = por %p318, %p319
      %p321 = scmp.ne.s32.totalorder %s313, %s316
      %p322 = scmp.eq.s32.totalorder %s31, 0
      %p323 = por %p321, %p322
      %p324 = scmp.ne.s32.totalorder %s313, %s316
      %p325 = scmp.eq.s32.totalorder %s36, 3
      %p326 = por %p324, %p325
      %p327 = scmp.ne.s32.totalorder %s316, %s317
      %p328 = scmp.eq.s32.totalorder %s36, 0
      %p329 = por %p327, %p328
      %p330 = scmp.ne.s32.totalorder %s316, %s317
      %p331 = scmp.eq.s32.totalorder %s37, 3
      %p332 = por %p330, %p331
      %p334 = scmp.ne.s32.totalorder %s317, %s333
      %p335 = scmp.eq.s32.totalorder %s37, 0
      %p336 = por %p334, %p335
      %s337 = ssub.s32 %s39, %s46
      %p338 = scmp.eq.s32.totalorder %s337, 0
      %s340 = sadd.s32 %s339, 1
      %s341 = scalar_select %p338, %s339, %s340
      %p344 = pneg %p338
      %p345 = scmp.eq.s32.totalorder %s31, 3
      %p346 = por %p344, %p345
      %p347 = scmp.ne.s32.totalorder %s339, %s342
      %p348 = scmp.eq.s32.totalorder %s31, 0
      %p349 = por %p347, %p348
      %p350 = scmp.ne.s32.totalorder %s339, %s342
      %p351 = scmp.eq.s32.totalorder %s36, 3
      %p352 = por %p350, %p351
      %p353 = scmp.ne.s32.totalorder %s342, %s343
      %p354 = scmp.eq.s32.totalorder %s36, 0
      %p355 = por %p353, %p354
      %p356 = scmp.ne.s32.totalorder %s342, %s343
      %p357 = scmp.eq.s32.totalorder %s37, 3
      %p358 = por %p356, %p357
      %p360 = scmp.ne.s32.totalorder %s343, %s359
      %p361 = scmp.eq.s32.totalorder %s37, 0
      %p362 = por %p360, %p361
      %s363 = ssub.s32 %s39, %s46
      %p364 = scmp.eq.s32.totalorder %s363, 0
      %s366 = sadd.s32 %s365, 1
      %s367 = scalar_select %p364, %s365, %s366
      %p370 = pneg %p364
      %p371 = scmp.eq.s32.totalorder %s31, 3
      %p372 = por %p370, %p371
      %p373 = scmp.ne.s32.totalorder %s365, %s368
      %p374 = scmp.eq.s32.totalorder %s31, 0
      %p375 = por %p373, %p374
      %p376 = scmp.ne.s32.totalorder %s365, %s368
      %p377 = scmp.eq.s32.totalorder %s36, 3
      %p378 = por %p376, %p377
      %p379 = scmp.ne.s32.totalorder %s368, %s369
      %p380 = scmp.eq.s32.totalorder %s36, 0
      %p381 = por %p379, %p380
      %p382 = scmp.ne.s32.totalorder %s368, %s369
      %p383 = scmp.eq.s32.totalorder %s37, 3
      %p384 = por %p382, %p383
      %p386 = scmp.ne.s32.totalorder %s369, %s385
      %p387 = scmp.eq.s32.totalorder %s37, 0
      %p388 = por %p386, %p387
      %s389 = ssub.s32 %s39, %s46
      %p390 = scmp.eq.s32.totalorder %s389, 0
      %s392 = sadd.s32 %s391, 1
      %s393 = scalar_select %p390, %s391, %s392
      %p396 = pneg %p390
      %p397 = scmp.eq.s32.totalorder %s31, 3
      %p398 = por %p396, %p397
      %p399 = scmp.ne.s32.totalorder %s391, %s394
      %p400 = scmp.eq.s32.totalorder %s31, 0
      %p401 = por %p399, %p400
      %p402 = scmp.ne.s32.totalorder %s391, %s394
      %p403 = scmp.eq.s32.totalorder %s36, 3
      %p404 = por %p402, %p403
      %p405 = scmp.ne.s32.totalorder %s394, %s395
      %p406 = scmp.eq.s32.totalorder %s36, 0
      %p407 = por %p405, %p406
      %p408 = scmp.ne.s32.totalorder %s394, %s395
      %p409 = scmp.eq.s32.totalorder %s37, 3
      %p410 = por %p408, %p409
      %p412 = scmp.ne.s32.totalorder %s395, %s411
      %p413 = scmp.eq.s32.totalorder %s37, 0
      %p414 = por %p412, %p413
      %s416 = sadd.s32 %s415, 1
      %p419 = scmp.eq.s32.totalorder %s31, 3
      %p420 = scmp.ne.s32.totalorder %s415, %s417
      %p421 = scmp.eq.s32.totalorder %s31, 0
      %p422 = por %p420, %p421
      %p423 = scmp.ne.s32.totalorder %s415, %s417
      %p424 = scmp.eq.s32.totalorder %s36, 3
      %p425 = por %p423, %p424
      %p426 = scmp.ne.s32.totalorder %s417, %s418
      %p427 = scmp.eq.s32.totalorder %s36, 0
      %p428 = por %p426, %p427
      %p429 = scmp.ne.s32.totalorder %s417, %s418
      %p430 = scmp.eq.s32.totalorder %s37, 3
      %p431 = por %p429, %p430
      %p433 = scmp.ne.s32.totalorder %s418, %s432
      %p434 = scmp.eq.s32.totalorder %s37, 0
      %p435 = por %p433, %p434
      %s437 = sadd.s32 %s436, 1
      %p440 = scmp.eq.s32.totalorder %s31, 3
      %p441 = scmp.ne.s32.totalorder %s436, %s438
      %p442 = scmp.eq.s32.totalorder %s31, 0
      %p443 = por %p441, %p442
      %p444 = scmp.ne.s32.totalorder %s436, %s438
      %p445 = scmp.eq.s32.totalorder %s36, 3
      %p446 = por %p444, %p445
      %p447 = scmp.ne.s32.totalorder %s438, %s439
      %p448 = scmp.eq.s32.totalorder %s36, 0
      %p449 = por %p447, %p448
      %p450 = scmp.ne.s32.totalorder %s438, %s439
      %p451 = scmp.eq.s32.totalorder %s37, 3
      %p452 = por %p450, %p451
      %p454 = scmp.ne.s32.totalorder %s439, %s453
      %p455 = scmp.eq.s32.totalorder %s37, 0
      %p456 = por %p454, %p455
      %s457 = ssub.s32 %s38, %s50
      %p458 = scmp.eq.s32.totalorder %s457, 0
      %s460 = sadd.s32 %s459, 1
      %s461 = scalar_select %p458, %s459, %s460
      %p464 = pneg %p458
      %p465 = scmp.eq.s32.totalorder %s31, 3
      %p466 = por %p464, %p465
      %p467 = scmp.ne.s32.totalorder %s459, %s462
      %p468 = scmp.eq.s32.totalorder %s31, 0
      %p469 = por %p467, %p468
      %p470 = scmp.ne.s32.totalorder %s459, %s462
      %p471 = scmp.eq.s32.totalorder %s36, 3
      %p472 = por %p470, %p471
      %p473 = scmp.ne.s32.totalorder %s462, %s463
      %p474 = scmp.eq.s32.totalorder %s36, 0
      %p475 = por %p473, %p474
      %p476 = scmp.ne.s32.totalorder %s462, %s463
      %p477 = scmp.eq.s32.totalorder %s37, 3
      %p478 = por %p476, %p477
      %p480 = scmp.ne.s32.totalorder %s463, %s479
      %p481 = scmp.eq.s32.totalorder %s37, 0
      %p482 = por %p480, %p481
      %s483 = ssub.s32 %s38, %s50
      %s484 = ssub.s32 %s39, %s46
      %s485 = sor.u32 %s483, %s484
      %p486 = scmp.eq.s32.totalorder %s485, 0
      %s488 = sadd.s32 %s487, 1
      %s489 = scalar_select %p486, %s487, %s488
      %p492 = pneg %p486
      %p493 = scmp.eq.s32.totalorder %s31, 3
      %p494 = por %p492, %p493
      %p495 = scmp.ne.s32.totalorder %s487, %s490
      %p496 = scmp.eq.s32.totalorder %s31, 0
      %p497 = por %p495, %p496
      %p498 = scmp.ne.s32.totalorder %s487, %s490
      %p499 = scmp.eq.s32.totalorder %s36, 3
      %p500 = por %p498, %p499
      %p501 = scmp.ne.s32.totalorder %s490, %s491
      %p502 = scmp.eq.s32.totalorder %s36, 0
      %p503 = por %p501, %p502
      %p504 = scmp.ne.s32.totalorder %s490, %s491
      %p505 = scmp.eq.s32.totalorder %s37, 3
      %p506 = por %p504, %p505
      %p508 = scmp.ne.s32.totalorder %s491, %s507
      %p509 = scmp.eq.s32.totalorder %s37, 0
      %p510 = por %p508, %p509
      %s511 = ssub.s32 %s38, %s50
      %s512 = ssub.s32 %s39, %s46
      %s513 = sor.u32 %s511, %s512
      %p514 = scmp.eq.s32.totalorder %s513, 0
      %s516 = sadd.s32 %s515, 1
      %s517 = scalar_select %p514, %s515, %s516
      %p520 = pneg %p514
      %p521 = scmp.eq.s32.totalorder %s31, 3
      %p522 = por %p520, %p521
      %p523 = scmp.ne.s32.totalorder %s515, %s518
      %p524 = scmp.eq.s32.totalorder %s31, 0
      %p525 = por %p523, %p524
      %p526 = scmp.ne.s32.totalorder %s515, %s518
      %p527 = scmp.eq.s32.totalorder %s36, 3
      %p528 = por %p526, %p527
      %p529 = scmp.ne.s32.totalorder %s518, %s519
      %p530 = scmp.eq.s32.totalorder %s36, 0
      %p531 = por %p529, %p530
      %p532 = scmp.ne.s32.totalorder %s518, %s519
      %p533 = scmp.eq.s32.totalorder %s37, 3
      %p534 = por %p532, %p533
      %p536 = scmp.ne.s32.totalorder %s519, %s535
      %p537 = scmp.eq.s32.totalorder %s37, 0
      %p538 = por %p536, %p537
      %p539 = scmp.le.s32.totalorder 1, %s31
      %p540 = scmp.lt.s32.totalorder %s31, 5
      %p541 = pnand %p539, %p540
      %p542 = pneg %p541
      // Predicated region
      $region9: #{tpu_custom_call.1} parent=5 // pred_check
        _
      $region10: #{tpu_custom_call.1} parent=5 // pred_check_branch
        %544 = sbr.rel (%p541) target = $region12
      $region11: #{tpu_custom_call.1} parent=5 // pred_region
        %s545 = ssub.s32 %s31, 1
        // Predicated region
        $region13: #{tpu_custom_call.1} parent=11 // pred_check
          %p546 = pneg %p428
        $region14: #{tpu_custom_call.1} parent=11 // pred_check_branch
          %548 = sbr.rel (%p546) target = $region16
        $region15: #{tpu_custom_call.1} parent=11 // pred_region
          _
        $region16: #{tpu_custom_call.1} parent=11 // pred_fallthru
          _
        // Predicated region
        $region17: #{tpu_custom_call.1} parent=11 // pred_check
          %p549 = pneg %p449
        $region18: #{tpu_custom_call.1} parent=11 // pred_check_branch
          %551 = sbr.rel (%p549) target = $region20
        $region19: #{tpu_custom_call.1} parent=11 // pred_region
          _
        $region20: #{tpu_custom_call.1} parent=11 // pred_fallthru
          _
      $region12: #{tpu_custom_call.1} parent=5 // pred_fallthru
        _
      %p552 = scmp.lt.s32.totalorder %s31, 4
      // Predicated region
      $region21: #{tpu_custom_call.1} parent=5 // pred_check
        %p553 = pneg %p552
      $region22: #{tpu_custom_call.1} parent=5 // pred_check_branch
        %555 = sbr.rel (%p553) target = $region24
      $region23: #{tpu_custom_call.1} parent=5 // pred_region
        // Predicated region
        $region25: #{tpu_custom_call.1} parent=23 // pred_check
          %p556 = pneg %p63
        $region26: #{tpu_custom_call.1} parent=23 // pred_check_branch
          %558 = sbr.rel (%p556) target = $region28
        $region27: #{tpu_custom_call.1} parent=23 // pred_region
          %p559 = scmp.lt.s32.totalorder %s38, 1
          %s560 = scalar_select %p559, %s38, 1
          %s561 = smul.addr %s560, 8
          %s562 = scalar_lea.vmem %s0, %s561
        $region28: #{tpu_custom_call.1} parent=23 // pred_fallthru
          _
        // Predicated region
        $region29: #{tpu_custom_call.1} parent=23 // pred_check
          %p563 = pneg %p89
        $region30: #{tpu_custom_call.1} parent=23 // pred_check_branch
          %565 = sbr.rel (%p563) target = $region32
        $region31: #{tpu_custom_call.1} parent=23 // pred_region
          %p566 = scmp.lt.s32.totalorder %s38, 1
          %s567 = scalar_select %p566, %s38, 1
          %s568 = scalar_lea.vmem %s1, %s567
        $region32: #{tpu_custom_call.1} parent=23 // pred_fallthru
          _
        // Predicated region
        $region33: #{tpu_custom_call.1} parent=23 // pred_check
          %p569 = pneg %p115
        $region34: #{tpu_custom_call.1} parent=23 // pred_check_branch
          %571 = sbr.rel (%p569) target = $region36
        $region35: #{tpu_custom_call.1} parent=23 // pred_region
          %p572 = scmp.lt.s32.totalorder %s39, 1
          %s573 = scalar_select %p572, %s39, 1
          %s574 = scalar_lea.vmem %s2, %s573
        $region36: #{tpu_custom_call.1} parent=23 // pred_fallthru
          _
        // Predicated region
        $region37: #{tpu_custom_call.1} parent=23 // pred_check
          %p575 = pneg %p141
        $region38: #{tpu_custom_call.1} parent=23 // pred_check_branch
          %577 = sbr.rel (%p575) target = $region40
        $region39: #{tpu_custom_call.1} parent=23 // pred_region
          %p578 = scmp.lt.s32.totalorder %s39, 1
          %s579 = scalar_select %p578, %s39, 1
          %s580 = scalar_lea.vmem %s3, %s579
        $region40: #{tpu_custom_call.1} parent=23 // pred_fallthru
          _
        // Predicated region
        $region41: #{tpu_custom_call.1} parent=23 // pred_check
          %p581 = pneg %p167
        $region42: #{tpu_custom_call.1} parent=23 // pred_check_branch
          %583 = sbr.rel (%p581) target = $region44
        $region43: #{tpu_custom_call.1} parent=23 // pred_region
          %p584 = scmp.lt.s32.totalorder %s39, 1
          %s585 = scalar_select %p584, %s39, 1
          %s586 = smul.addr %s585, 4
          %s587 = smul.addr %s586, 4
          %s588 = scalar_lea.vmem %s4, %s587
        $region44: #{tpu_custom_call.1} parent=23 // pred_fallthru
          _
        // Predicated region
        $region45: #{tpu_custom_call.1} parent=23 // pred_check
          %p589 = pneg %p193
        $region46: #{tpu_custom_call.1} parent=23 // pred_check_branch
          %591 = sbr.rel (%p589) target = $region48
        $region47: #{tpu_custom_call.1} parent=23 // pred_region
          %p592 = scmp.lt.s32.totalorder %s39, 1
          %s593 = scalar_select %p592, %s39, 1
          %s594 = scalar_lea.vmem %s5, %s593
        $region48: #{tpu_custom_call.1} parent=23 // pred_fallthru
          _
        // Predicated region
        $region49: #{tpu_custom_call.1} parent=23 // pred_check
          %p595 = pneg %p219
        $region50: #{tpu_custom_call.1} parent=23 // pred_check_branch
          %597 = sbr.rel (%p595) target = $region52
        $region51: #{tpu_custom_call.1} parent=23 // pred_region
          %p598 = scmp.lt.s32.totalorder %s39, 1
          %s599 = scalar_select %p598, %s39, 1
          %s600 = smul.addr %s599, 4
          %s601 = smul.addr %s600, 4
          %s602 = scalar_lea.vmem %s6, %s601
        $region52: #{tpu_custom_call.1} parent=23 // pred_fallthru
          _
        // Predicated region
        $region53: #{tpu_custom_call.1} parent=23 // pred_check
          %p603 = pneg %p245
        $region54: #{tpu_custom_call.1} parent=23 // pred_check_branch
          %605 = sbr.rel (%p603) target = $region56
        $region55: #{tpu_custom_call.1} parent=23 // pred_region
          %p606 = scmp.lt.s32.totalorder %s39, 1
          %s607 = scalar_select %p606, %s39, 1
          %s608 = scalar_lea.vmem %s7, %s607
        $region56: #{tpu_custom_call.1} parent=23 // pred_fallthru
          _
        // Predicated region
        $region57: #{tpu_custom_call.1} parent=23 // pred_check
          %p609 = pneg %p271
        $region58: #{tpu_custom_call.1} parent=23 // pred_check_branch
          %611 = sbr.rel (%p609) target = $region60
        $region59: #{tpu_custom_call.1} parent=23 // pred_region
          %p612 = scmp.lt.s32.totalorder %s39, 1
          %s613 = scalar_select %p612, %s39, 1
          %s614 = scalar_lea.vmem %s8, %s613
        $region60: #{tpu_custom_call.1} parent=23 // pred_fallthru
          _
        // Predicated region
        $region61: #{tpu_custom_call.1} parent=23 // pred_check
          %p615 = pneg %p297
        $region62: #{tpu_custom_call.1} parent=23 // pred_check_branch
          %617 = sbr.rel (%p615) target = $region64
        $region63: #{tpu_custom_call.1} parent=23 // pred_region
          %p618 = scmp.lt.s32.totalorder %s39, 1
          %s619 = scalar_select %p618, %s39, 1
          %s620 = scalar_lea.vmem %s9, %s619
        $region64: #{tpu_custom_call.1} parent=23 // pred_fallthru
          _
        // Predicated region
        $region65: #{tpu_custom_call.1} parent=23 // pred_check
          %p621 = pneg %p323
        $region66: #{tpu_custom_call.1} parent=23 // pred_check_branch
          %623 = sbr.rel (%p621) target = $region68
        $region67: #{tpu_custom_call.1} parent=23 // pred_region
          %p624 = scmp.lt.s32.totalorder %s39, 1
          %s625 = scalar_select %p624, %s39, 1
          %s626 = smul.addr %s625, 4
          %s627 = smul.addr %s626, 4
          %s628 = scalar_lea.vmem %s10, %s627
        $region68: #{tpu_custom_call.1} parent=23 // pred_fallthru
          _
        // Predicated region
        $region69: #{tpu_custom_call.1} parent=23 // pred_check
          %p629 = pneg %p349
        $region70: #{tpu_custom_call.1} parent=23 // pred_check_branch
          %631 = sbr.rel (%p629) target = $region72
        $region71: #{tpu_custom_call.1} parent=23 // pred_region
          %p632 = scmp.lt.s32.totalorder %s39, 1
          %s633 = scalar_select %p632, %s39, 1
          %s634 = scalar_lea.vmem %s11, %s633
        $region72: #{tpu_custom_call.1} parent=23 // pred_fallthru
          _
        // Predicated region
        $region73: #{tpu_custom_call.1} parent=23 // pred_check
          %p635 = pneg %p375
        $region74: #{tpu_custom_call.1} parent=23 // pred_check_branch
          %637 = sbr.rel (%p635) target = $region76
        $region75: #{tpu_custom_call.1} parent=23 // pred_region
          %p638 = scmp.lt.s32.totalorder %s39, 1
          %s639 = scalar_select %p638, %s39, 1
          %s640 = smul.addr %s639, 16
          %s641 = smul.addr %s640, 4
          %s642 = scalar_lea.vmem %s12, %s641
        $region76: #{tpu_custom_call.1} parent=23 // pred_fallthru
          _
        // Predicated region
        $region77: #{tpu_custom_call.1} parent=23 // pred_check
          %p643 = pneg %p401
        $region78: #{tpu_custom_call.1} parent=23 // pred_check_branch
          %645 = sbr.rel (%p643) target = $region80
        $region79: #{tpu_custom_call.1} parent=23 // pred_region
          %p646 = scmp.lt.s32.totalorder %s39, 1
          %s647 = scalar_select %p646, %s39, 1
          %s648 = scalar_lea.vmem %s13, %s647
        $region80: #{tpu_custom_call.1} parent=23 // pred_fallthru
          _
      $region24: #{tpu_custom_call.1} parent=5 // pred_fallthru
        _
      %p649 = scmp.le.s32.totalorder 1, %s31
      %p650 = scmp.lt.s32.totalorder %s31, 5
      %p651 = pnand %p649, %p650
      %p652 = pneg %p651
      // Predicated region
      $region81: #{tpu_custom_call.1} parent=5 // pred_check
        _
      $region82: #{tpu_custom_call.1} parent=5 // pred_check_branch
        %654 = sbr.rel (%p651) target = $region84
      $region83: #{tpu_custom_call.1} parent=5 // pred_region
        %s655 = ssub.s32 %s31, 1
        %p656 = scmp.lt.s32.totalorder %s40, 1
        %s657 = scalar_select %p656, %s40, 1
        %s658 = smul.addr %s657, 8
        %s659 = scalar_lea.vmem %s0, %s658
        %p660 = pneg %p69
        %p661 = pneg %p66
        %p662 = scmp.lt.s32.totalorder %s40, 1
        %s663 = scalar_select %p662, %s40, 1
        %s664 = scalar_lea.vmem %s1, %s663
        %p665 = pneg %p95
        %p666 = pneg %p92
        %p667 = scmp.lt.s32.totalorder %s41, 1
        %s668 = scalar_select %p667, %s41, 1
        %s669 = scalar_lea.vmem %s2, %s668
        %p670 = pneg %p121
        %p671 = pneg %p118
        %p672 = scmp.lt.s32.totalorder %s41, 1
        %s673 = scalar_select %p672, %s41, 1
        %s674 = scalar_lea.vmem %s3, %s673
        %p675 = pneg %p147
        %p676 = pneg %p144
        %p677 = scmp.lt.s32.totalorder %s41, 1
        %s678 = scalar_select %p677, %s41, 1
        %s679 = smul.addr %s678, 4
        %s680 = smul.addr %s679, 4
        %s681 = scalar_lea.vmem %s4, %s680
        %p682 = pneg %p173
        %p683 = pneg %p170
        %p684 = scmp.lt.s32.totalorder %s41, 1
        %s685 = scalar_select %p684, %s41, 1
        %s686 = scalar_lea.vmem %s5, %s685
        %p687 = pneg %p199
        %p688 = pneg %p196
        %p689 = scmp.lt.s32.totalorder %s41, 1
        %s690 = scalar_select %p689, %s41, 1
        %s691 = smul.addr %s690, 4
        %s692 = smul.addr %s691, 4
        %s693 = scalar_lea.vmem %s6, %s692
        %p694 = pneg %p225
        %p695 = pneg %p222
        %p696 = scmp.lt.s32.totalorder %s41, 1
        %s697 = scalar_select %p696, %s41, 1
        %s698 = scalar_lea.vmem %s7, %s697
        %p699 = pneg %p251
        %p700 = pneg %p248
        %p701 = scmp.lt.s32.totalorder %s41, 1
        %s702 = scalar_select %p701, %s41, 1
        %s703 = scalar_lea.vmem %s8, %s702
        %p704 = pneg %p277
        %p705 = pneg %p274
        %p706 = scmp.lt.s32.totalorder %s41, 1
        %s707 = scalar_select %p706, %s41, 1
        %s708 = scalar_lea.vmem %s9, %s707
        %p709 = pneg %p303
        %p710 = pneg %p300
        %p711 = scmp.lt.s32.totalorder %s41, 1
        %s712 = scalar_select %p711, %s41, 1
        %s713 = smul.addr %s712, 4
        %s714 = smul.addr %s713, 4
        %s715 = scalar_lea.vmem %s10, %s714
        %p716 = pneg %p329
        %p717 = pneg %p326
        %p718 = scmp.lt.s32.totalorder %s41, 1
        %s719 = scalar_select %p718, %s41, 1
        %s720 = scalar_lea.vmem %s11, %s719
        %p721 = pneg %p355
        %p722 = pneg %p352
        %p723 = scmp.lt.s32.totalorder %s41, 1
        %s724 = scalar_select %p723, %s41, 1
        %s725 = smul.addr %s724, 16
        %s726 = smul.addr %s725, 4
        %s727 = scalar_lea.vmem %s12, %s726
        %p728 = pneg %p381
        %p729 = pneg %p378
        %p730 = scmp.lt.s32.totalorder %s41, 1
        %s731 = scalar_select %p730, %s41, 1
        %s732 = scalar_lea.vmem %s13, %s731
        %p733 = pneg %p407
        %p734 = pneg %p404
        %p735 = pneg %p428
        %p736 = pneg %p425
        %p737 = pneg %p449
        %p738 = pneg %p446
        %p739 = pneg %p475
        %p740 = pneg %p472
        %s741 = sand.u32 %s462, 1
        %s742 = scalar_lea.sflag [#allocation4], %s741
        %s743 = sand.u32 %s462, 1
        %s744 = smul.addr %s743, 8
        %s745 = scalar_lea.vmem [#allocation3], %s744
        %p746 = pneg %p503
        %p747 = pneg %p500
        %s748 = sand.u32 %s36, 1
        %s749 = scalar_lea.sflag [#allocation6], %s748
        %s750 = sand.u32 %s490, 1
        %s751 = smul.addr %s750, 4
        %s752 = scalar_lea.vmem [#allocation5], %s751
        %p753 = pneg %p531
        %p754 = pneg %p528
        %s755 = sand.u32 %s36, 1
        %s756 = scalar_lea.sflag [#allocation6], %s755
        %s757 = sand.u32 %s518, 1
        %s758 = smul.addr %s757, 4
        %s759 = scalar_lea.vmem [#allocation7], %s758
        %p760 = scmp.lt.s32.totalorder %s40, 1
        %s761 = scalar_select %p760, %s40, 1
        %s762 = smul.addr %s761, 8
        %s763 = scalar_lea.vmem %s0, %s762
        %p764 = scmp.lt.s32.totalorder %s40, 1
        %s765 = scalar_select %p764, %s40, 1
        %s766 = scalar_lea.vmem %s1, %s765
        %p767 = scmp.lt.s32.totalorder %s41, 1
        %s768 = scalar_select %p767, %s41, 1
        %s769 = scalar_lea.vmem %s2, %s768
        %p770 = scmp.lt.s32.totalorder %s41, 1
        %s771 = scalar_select %p770, %s41, 1
        %s772 = scalar_lea.vmem %s3, %s771
        %p773 = scmp.lt.s32.totalorder %s41, 1
        %s774 = scalar_select %p773, %s41, 1
        %s775 = smul.addr %s774, 4
        %s776 = smul.addr %s775, 4
        %s777 = scalar_lea.vmem %s4, %s776
        %p778 = scmp.lt.s32.totalorder %s41, 1
        %s779 = scalar_select %p778, %s41, 1
        %s780 = scalar_lea.vmem %s5, %s779
        %p781 = scmp.lt.s32.totalorder %s41, 1
        %s782 = scalar_select %p781, %s41, 1
        %s783 = smul.addr %s782, 4
        %s784 = smul.addr %s783, 4
        %s785 = scalar_lea.vmem %s6, %s784
        %p786 = scmp.lt.s32.totalorder %s41, 1
        %s787 = scalar_select %p786, %s41, 1
        %s788 = scalar_lea.vmem %s7, %s787
        %p789 = scmp.lt.s32.totalorder %s41, 1
        %s790 = scalar_select %p789, %s41, 1
        %s791 = scalar_lea.vmem %s8, %s790
        %p792 = scmp.lt.s32.totalorder %s41, 1
        %s793 = scalar_select %p792, %s41, 1
        %s794 = scalar_lea.vmem %s9, %s793
        %p795 = scmp.lt.s32.totalorder %s41, 1
        %s796 = scalar_select %p795, %s41, 1
        %s797 = smul.addr %s796, 4
        %s798 = smul.addr %s797, 4
        %s799 = scalar_lea.vmem %s10, %s798
        %p800 = scmp.lt.s32.totalorder %s41, 1
        %s801 = scalar_select %p800, %s41, 1
        %s802 = scalar_lea.vmem %s11, %s801
        %p803 = scmp.lt.s32.totalorder %s41, 1
        %s804 = scalar_select %p803, %s41, 1
        %s805 = smul.addr %s804, 16
        %s806 = smul.addr %s805, 4
        %s807 = scalar_lea.vmem %s12, %s806
        %p808 = scmp.lt.s32.totalorder %s41, 1
        %s809 = scalar_select %p808, %s41, 1
        %s810 = scalar_lea.vmem %s13, %s809
        %p812 = scmp.eq.s32.totalorder %s41, 0
        // Predicated region
        $region85: #{tpu_custom_call.1} parent=83 // pred_check
          %p813 = pneg %p812
        $region86: #{tpu_custom_call.1} parent=83 // pred_check_branch
          %815 = sbr.rel (%p813) target = $region88
        $region87: #{tpu_custom_call.1} parent=83 // pred_region
          %v816 = vld [vmem:[%s763] sm:$0xff]
          %vm817 = vcmask 261120
          %818 = vst.msk [vmem:[%s745] sm:$0xff] %vm817, %v816
        $region88: #{tpu_custom_call.1} parent=83 // pred_fallthru
          _
        %v819 = vld [vmem:[%s745] sm:$0xff]
        %v820 = vld [vmem:[%s766] sm:$0x1]
        %vm821 = vcmp.gt.f32.partialorder %v820, 0.0
        %v822 = vlaneseq
        %v823 = vshrl.u32 %v822, 7
        %v824 = vlaneseq
        %v825 = vand.u32 %v824, 127
        %vm826 = vcmp.gt.s32.totalorder %v825, %v823
        %v827 = vsel %vm821, 1, 0
        %v828 = vlaneseq
        %v829 = vshrl.u32 %v828, 7
        %v830 = vsub.s32 0, %v829
        %v831 = vrot.slane %v827, %v830
        %vm832 = vcmp.eq.s32.totalorder %v831, 1
        %vm833 = vmor %vm832, %vm826
        %v834 = vld [vmem:[%s769] sm:$0x1]
        %v835 = vld [vmem:[%s772] sm:$0x1]
        %vm836 = vcmask 261120
        %v837 = vsel %vm836, %v819, 0.0
        %838 = vadd.xlane.f32.xlu0 %v837
        %v839 = vpop.xlane.xlu0 %838
        %v840 = vrcp.pop 32.0
        %v841 = vmul.f32 %v839, %v840
        %v842 = vsub.f32 %v819, %v841
        %v843 = vmul.f32 %v842, %v842
        %v844 = vsel %vm836, %v843, 0.0
        %845 = vadd.xlane.f32.xlu0 %v844
        %v846 = vpop.xlane.xlu0 %845
        %v847 = vmul.f32 %v846, %v840
        %v848 = vadd.f32 %v847, 1e-05
        %v849 = vrsqrt.pop %v848
        %v850 = vmul.f32 %v842, %v849
        %v852 = vlaneseq
        %v853 = vshrl.u32 %v852, 7
        %v854 = vsub.s32 0, %v853
        %v855 = vrot.slane %v834, %v854
        %v857 = vmul.f32 %v850, %v855
        %v859 = vlaneseq
        %v860 = vshrl.u32 %v859, 7
        %v861 = vsub.s32 0, %v860
        %v862 = vrot.slane %v835, %v861
        %v864 = vadd.f32 %v857, %v862
        %v865 = vpack.c.bf16 %v864, %v864
        %v866 = vld [vmem:[%s777] sm:$0xf]
        %v867 = vld [vmem:[%s777 + $0x4] sm:$0xf]
        %v868 = vld [vmem:[%s777 + $0x8] sm:$0xf]
        %v869 = vld [vmem:[%s777 + $0xc] sm:$0xf]
        %v870 = vld [vmem:[%s780] sm:$0x1]
        %v872 = vlaneseq
        %v873 = vshrl.u32 %v872, 7
        %v874 = vsub.s32 0, %v873
        %v875 = vrot.slane %v870, %v874
        %v881 = vunpack.c.l.b16 %v866
        %v882 = vunpack.c.l.b16 %v867
        %v883 = vunpack.c.l.b16 %v868
        %v884 = vunpack.c.l.b16 %v869
        %v885 = vpack.c.b16 %v882, %v881
        %v886 = vpack.c.b16 %v884, %v883
        %v890 = vsel %vm836, %v865, 0
        %892 = vmatprep.subr.bf16.mxu0 0
        %893 = vmatpush1.bf16.msra.mxu0 0
        %894 = vmatprep.subr.bf16.mxu0 0
        %895 = vmatpush1.bf16.msra.mxu0 0
        %896 = vmatprep.subr.bf16.mxu0 0
        %897 = vmatpush1.bf16.msra.mxu0 0
        %898 = vmatprep.subr.bf16.mxu0 0
        %899 = vmatpush1.bf16.msra.mxu0 0
        %900 = vmatprep.subr.bf16.mxu0 0
        %901 = vmatpush1.bf16.msra.mxu0 0
        %902 = vmatprep.subr.bf16.mxu0 0
        %903 = vmatpush1.bf16.msra.mxu0 0
        %904 = vmatprep.subr.bf16.mxu0 0
        %905 = vmatpush1.bf16.msra.mxu0 %v886
        %906 = vmatprep.subr.bf16.mxu0 0
        %907 = vmatpush1.bf16.msra.mxu0 %v885
        %908 = vmatprep.subr.bf16.mxu0 0
        %909 = vmatpush2.bf16.msra.mxu0 0
        %910 = vmatprep.subr.bf16.mxu0 0
        %911 = vmatpush2.bf16.msra.mxu0 0
        %912 = vmatprep.subr.bf16.mxu0 0
        %913 = vmatpush2.bf16.msra.mxu0 0
        %914 = vmatprep.subr.bf16.mxu0 0
        %915 = vmatpush2.bf16.msra.mxu0 0
        %916 = vmatprep.subr.bf16.mxu0 0
        %917 = vmatpush2.bf16.msra.mxu0 0
        %918 = vmatprep.subr.bf16.mxu0 0
        %919 = vmatpush2.bf16.msra.mxu0 0
        %920 = vmatprep.subr.bf16.mxu0 0
        %921 = vmatpush2.bf16.msra.mxu0 0
        %922 = vmatprep.subr.bf16.mxu0 0
        %923 = vmatpush2.bf16.msra.mxu0 0
        %924 = vmatprep.mubr.bf16.mxu0 0
        %925 = vmatmul.mubr.bf16.gmra.mxu0 %v890
        %v926 = vpop.f32.mrf.mxu0
        %v927 = vadd.f32 %v875, %v926
        %v928 = vpop.f32.mrf.mxu0
        %v929 = vpop.f32.mrf.mxu0
        %v930 = vpop.f32.mrf.mxu0
        %931 = vdwg.mxu0
        %v932 = vpack.c.bf16 %v927, %v927
        %v934 = vunpack.c.l.b16 %v932
        %v935 = vpack.c.b16 %v934, %v934
        %936 = vrot.lane.b32.xlu0 %v935, 96
        %v937 = vpop.permute.xlu0 %936
        %vm939 = vcmask 257024
        %940 = vst.msk [vmem:[%s752] sm:$0xf] %vm939, %v937
        %941 = vrot.lane.b32.xlu0 %v935, 64
        %v942 = vpop.permute.xlu0 %941
        %944 = vst.msk [vmem:[%s759] sm:$0xf] %vm939, %v942
        %945 = vrot.lane.b32.xlu0 %v932, 96
        %v946 = vpop.permute.xlu0 %945
        %vm947 = vcmask 64512
        %v949 = vsel %vm947, %v932, 0
        %v952 = vsel %vm947, %v946, 0
        %954 = vmatprep.subr.bf16.mxu0 0
        %955 = vmatpush1.bf16.xpose.msra.mxu0 0
        %956 = vmatprep.subr.bf16.mxu0 0
        %957 = vmatpush1.bf16.xpose.msra.mxu0 0
        %958 = vmatprep.subr.bf16.mxu0 0
        %959 = vmatpush1.bf16.xpose.msra.mxu0 0
        %960 = vmatprep.subr.bf16.mxu0 0
        %961 = vmatpush1.bf16.xpose.msra.mxu0 0
        %962 = vmatprep.subr.bf16.mxu0 0
        %963 = vmatpush1.bf16.xpose.msra.mxu0 0
        %964 = vmatprep.subr.bf16.mxu0 0
        %965 = vmatpush1.bf16.xpose.msra.mxu0 0
        %966 = vmatprep.subr.bf16.mxu0 0
        %967 = vmatpush1.bf16.xpose.msra.mxu0 0
        %968 = vmatprep.subr.bf16.mxu0 0
        %969 = vmatpush1.bf16.xpose.msra.mxu0 %v952
        %970 = vmatprep.subr.bf16.mxu0 0
        %971 = vmatpush2.bf16.xpose.msra.mxu0 0
        %972 = vmatprep.subr.bf16.mxu0 0
        %973 = vmatpush2.bf16.xpose.msra.mxu0 0
        %974 = vmatprep.subr.bf16.mxu0 0
        %975 = vmatpush2.bf16.xpose.msra.mxu0 0
        %976 = vmatprep.subr.bf16.mxu0 0
        %977 = vmatpush2.bf16.xpose.msra.mxu0 0
        %978 = vmatprep.subr.bf16.mxu0 0
        %979 = vmatpush2.bf16.xpose.msra.mxu0 0
        %980 = vmatprep.subr.bf16.mxu0 0
        %981 = vmatpush2.bf16.xpose.msra.mxu0 0
        %982 = vmatprep.subr.bf16.mxu0 0
        %983 = vmatpush2.bf16.xpose.msra.mxu0 0
        %984 = vmatprep.subr.bf16.mxu0 0
        %985 = vmatpush2.bf16.xpose.msra.mxu0 0
        %986 = vmatprep.mubr.bf16.mxu0 0
        %987 = vmatmul.mubr.bf16.gmra.mxu0 %v949
        %v988 = vpop.f32.mrf.mxu0
        %v989 = vadd.f32 0.0, %v988
        %v990 = vpop.f32.mrf.mxu0
        %v991 = vpop.f32.mrf.mxu0
        %v992 = vpop.f32.mrf.mxu0
        %993 = vdwg.mxu0
        %v994 = vsel %vm833, -1e+09, %v989
        %v995 = vsel %vm947, %v994, -inf
        %996 = vmax.xlane.f32.xlu0 %v995
        %v997 = vpop.xlane.xlu0 %996
        %v998 = vsub.f32 %v994, %v997
        %v999 = vmul.f32 %v998, 1.442695
        %v1000 = vpow.pop %v999
        %v1001 = vsel %vm947, %v1000, 0.0
        %1002 = vadd.xlane.f32.xlu0 %v1001
        %v1003 = vpop.xlane.xlu0 %1002
        %v1004 = vrcp.pop %v1003
        %v1005 = vmul.f32 %v1000, %v1004
        %v1006 = vpack.c.bf16 %v1005, %v1005
        %1007 = vrot.lane.b32.xlu0 %v932, 64
        %v1008 = vpop.permute.xlu0 %1007
        %v1010 = vsel %vm947, %v1006, 0
        %vm1012 = vcmask 1043456
        %v1014 = vsel %vm1012, %v1008, 0
        %1016 = vmatprep.subr.bf16.mxu0 0
        %1017 = vmatpush1.bf16.msra.mxu0 0
        %1018 = vmatprep.subr.bf16.mxu0 0
        %1019 = vmatpush1.bf16.msra.mxu0 0
        %1020 = vmatprep.subr.bf16.mxu0 0
        %1021 = vmatpush1.bf16.msra.mxu0 0
        %1022 = vmatprep.subr.bf16.mxu0 0
        %1023 = vmatpush1.bf16.msra.mxu0 0
        %1024 = vmatprep.subr.bf16.mxu0 0
        %1025 = vmatpush1.bf16.msra.mxu0 0
        %1026 = vmatprep.subr.bf16.mxu0 0
        %1027 = vmatpush1.bf16.msra.mxu0 0
        %1028 = vmatprep.subr.bf16.mxu0 0
        %1029 = vmatpush1.bf16.msra.mxu0 0
        %1030 = vmatprep.subr.bf16.mxu0 0
        %1031 = vmatpush1.bf16.msra.mxu0 %v1014
        %1032 = vmatprep.subr.bf16.mxu0 0
        %1033 = vmatpush2.bf16.msra.mxu0 0
        %1034 = vmatprep.subr.bf16.mxu0 0
        %1035 = vmatpush2.bf16.msra.mxu0 0
        %1036 = vmatprep.subr.bf16.mxu0 0
        %1037 = vmatpush2.bf16.msra.mxu0 0
        %1038 = vmatprep.subr.bf16.mxu0 0
        %1039 = vmatpush2.bf16.msra.mxu0 0
        %1040 = vmatprep.subr.bf16.mxu0 0
        %1041 = vmatpush2.bf16.msra.mxu0 0
        %1042 = vmatprep.subr.bf16.mxu0 0
        %1043 = vmatpush2.bf16.msra.mxu0 0
        %1044 = vmatprep.subr.bf16.mxu0 0
        %1045 = vmatpush2.bf16.msra.mxu0 0
        %1046 = vmatprep.subr.bf16.mxu0 0
        %1047 = vmatpush2.bf16.msra.mxu0 0
        %1048 = vmatprep.mubr.bf16.mxu0 0
        %1049 = vmatmul.mubr.bf16.gmra.mxu0 %v1010
        %v1050 = vpop.f32.mrf.mxu0
        %v1051 = vadd.f32 0.0, %v1050
        %v1052 = vpop.f32.mrf.mxu0
        %v1053 = vpop.f32.mrf.mxu0
        %v1054 = vpop.f32.mrf.mxu0
        %1055 = vdwg.mxu0
        %v1056 = vpack.c.bf16 %v1051, %v1051
        %vm1057 = vcmask 60416
        %1058 = vst.msk [vmem:[#allocation2] sm:$0xf] %vm1057, %v1056
        %1059 = vrot.lane.b32.xlu0 %v932, 120
        %v1060 = vpop.permute.xlu0 %1059
        %1061 = vrot.lane.b32.xlu0 %v932, 88
        %v1062 = vpop.permute.xlu0 %1061
        %v1064 = vsel %vm947, %v1060, 0
        %v1067 = vsel %vm947, %v1062, 0
        %1069 = vmatprep.subr.bf16.mxu0 0
        %1070 = vmatpush1.bf16.xpose.msra.mxu0 0
        %1071 = vmatprep.subr.bf16.mxu0 0
        %1072 = vmatpush1.bf16.xpose.msra.mxu0 0
        %1073 = vmatprep.subr.bf16.mxu0 0
        %1074 = vmatpush1.bf16.xpose.msra.mxu0 0
        %1075 = vmatprep.subr.bf16.mxu0 0
        %1076 = vmatpush1.bf16.xpose.msra.mxu0 0
        %1077 = vmatprep.subr.bf16.mxu0 0
        %1078 = vmatpush1.bf16.xpose.msra.mxu0 0
        %1079 = vmatprep.subr.bf16.mxu0 0
        %1080 = vmatpush1.bf16.xpose.msra.mxu0 0
        %1081 = vmatprep.subr.bf16.mxu0 0
        %1082 = vmatpush1.bf16.xpose.msra.mxu0 0
        %1083 = vmatprep.subr.bf16.mxu0 0
        %1084 = vmatpush1.bf16.xpose.msra.mxu0 %v1067
        %1085 = vmatprep.subr.bf16.mxu0 0
        %1086 = vmatpush2.bf16.xpose.msra.mxu0 0
        %1087 = vmatprep.subr.bf16.mxu0 0
        %1088 = vmatpush2.bf16.xpose.msra.mxu0 0
        %1089 = vmatprep.subr.bf16.mxu0 0
        %1090 = vmatpush2.bf16.xpose.msra.mxu0 0
        %1091 = vmatprep.subr.bf16.mxu0 0
        %1092 = vmatpush2.bf16.xpose.msra.mxu0 0
        %1093 = vmatprep.subr.bf16.mxu0 0
        %1094 = vmatpush2.bf16.xpose.msra.mxu0 0
        %1095 = vmatprep.subr.bf16.mxu0 0
        %1096 = vmatpush2.bf16.xpose.msra.mxu0 0
        %1097 = vmatprep.subr.bf16.mxu0 0
        %1098 = vmatpush2.bf16.xpose.msra.mxu0 0
        %1099 = vmatprep.subr.bf16.mxu0 0
        %1100 = vmatpush2.bf16.xpose.msra.mxu0 0
        %1101 = vmatprep.mubr.bf16.mxu0 0
        %1102 = vmatmul.mubr.bf16.gmra.mxu0 %v1064
        %v1103 = vpop.f32.mrf.mxu0
        %v1104 = vadd.f32 0.0, %v1103
        %v1105 = vpop.f32.mrf.mxu0
        %v1106 = vpop.f32.mrf.mxu0
        %v1107 = vpop.f32.mrf.mxu0
        %1108 = vdwg.mxu0
        %v1109 = vsel %vm833, -1e+09, %v1104
        %v1110 = vsel %vm947, %v1109, -inf
        %1111 = vmax.xlane.f32.xlu0 %v1110
        %v1112 = vpop.xlane.xlu0 %1111
        %v1113 = vsub.f32 %v1109, %v1112
        %v1114 = vmul.f32 %v1113, 1.442695
        %v1115 = vpow.pop %v1114
        %v1116 = vsel %vm947, %v1115, 0.0
        %1117 = vadd.xlane.f32.xlu0 %v1116
        %v1118 = vpop.xlane.xlu0 %1117
        %v1119 = vrcp.pop %v1118
        %v1120 = vmul.f32 %v1115, %v1119
        %v1121 = vpack.c.bf16 %v1120, %v1120
        %1122 = vrot.lane.b32.xlu0 %v932, 56
        %v1123 = vpop.permute.xlu0 %1122
        %v1125 = vsel %vm947, %v1121, 0
        %v1128 = vsel %vm1012, %v1123, 0
        %1130 = vmatprep.subr.bf16.mxu0 0
        %1131 = vmatpush1.bf16.msra.mxu0 0
        %1132 = vmatprep.subr.bf16.mxu0 0
        %1133 = vmatpush1.bf16.msra.mxu0 0
        %1134 = vmatprep.subr.bf16.mxu0 0
        %1135 = vmatpush1.bf16.msra.mxu0 0
        %1136 = vmatprep.subr.bf16.mxu0 0
        %1137 = vmatpush1.bf16.msra.mxu0 0
        %1138 = vmatprep.subr.bf16.mxu0 0
        %1139 = vmatpush1.bf16.msra.mxu0 0
        %1140 = vmatprep.subr.bf16.mxu0 0
        %1141 = vmatpush1.bf16.msra.mxu0 0
        %1142 = vmatprep.subr.bf16.mxu0 0
        %1143 = vmatpush1.bf16.msra.mxu0 0
        %1144 = vmatprep.subr.bf16.mxu0 0
        %1145 = vmatpush1.bf16.msra.mxu0 %v1128
        %1146 = vmatprep.subr.bf16.mxu0 0
        %1147 = vmatpush2.bf16.msra.mxu0 0
        %1148 = vmatprep.subr.bf16.mxu0 0
        %1149 = vmatpush2.bf16.msra.mxu0 0
        %1150 = vmatprep.subr.bf16.mxu0 0
        %1151 = vmatpush2.bf16.msra.mxu0 0
        %1152 = vmatprep.subr.bf16.mxu0 0
        %1153 = vmatpush2.bf16.msra.mxu0 0
        %1154 = vmatprep.subr.bf16.mxu0 0
        %1155 = vmatpush2.bf16.msra.mxu0 0
        %1156 = vmatprep.subr.bf16.mxu0 0
        %1157 = vmatpush2.bf16.msra.mxu0 0
        %1158 = vmatprep.subr.bf16.mxu0 0
        %1159 = vmatpush2.bf16.msra.mxu0 0
        %1160 = vmatprep.subr.bf16.mxu0 0
        %1161 = vmatpush2.bf16.msra.mxu0 0
        %1162 = vmatprep.mubr.bf16.mxu0 0
        %1163 = vmatmul.mubr.bf16.gmra.mxu0 %v1125
        %v1164 = vpop.f32.mrf.mxu0
        %v1165 = vadd.f32 0.0, %v1164
        %v1166 = vpop.f32.mrf.mxu0
        %v1167 = vpop.f32.mrf.mxu0
        %v1168 = vpop.f32.mrf.mxu0
        %1169 = vdwg.mxu0
        %v1170 = vpack.c.bf16 %v1165, %v1165
        %v1172 = vunpack.c.l.b16 %v1170
        %v1173 = vpack.c.b16 %v1172, %v1172
        %1174 = vrot.lane.b32.xlu0 %v1173, 8
        %v1175 = vpop.permute.xlu0 %1174
        %vm1177 = vcmask 126016
        %1178 = vst.msk [vmem:[#allocation2] sm:$0xf] %vm1177, %v1175
        %1179 = vrot.lane.b32.xlu0 %v932, 112
        %v1180 = vpop.permute.xlu0 %1179
        %1181 = vrot.lane.b32.xlu0 %v932, 80
        %v1182 = vpop.permute.xlu0 %1181
        %v1184 = vsel %vm947, %v1180, 0
        %v1187 = vsel %vm947, %v1182, 0
        %1189 = vmatprep.subr.bf16.mxu0 0
        %1190 = vmatpush1.bf16.xpose.msra.mxu0 0
        %1191 = vmatprep.subr.bf16.mxu0 0
        %1192 = vmatpush1.bf16.xpose.msra.mxu0 0
        %1193 = vmatprep.subr.bf16.mxu0 0
        %1194 = vmatpush1.bf16.xpose.msra.mxu0 0
        %1195 = vmatprep.subr.bf16.mxu0 0
        %1196 = vmatpush1.bf16.xpose.msra.mxu0 0
        %1197 = vmatprep.subr.bf16.mxu0 0
        %1198 = vmatpush1.bf16.xpose.msra.mxu0 0
        %1199 = vmatprep.subr.bf16.mxu0 0
        %1200 = vmatpush1.bf16.xpose.msra.mxu0 0
        %1201 = vmatprep.subr.bf16.mxu0 0
        %1202 = vmatpush1.bf16.xpose.msra.mxu0 0
        %1203 = vmatprep.subr.bf16.mxu0 0
        %1204 = vmatpush1.bf16.xpose.msra.mxu0 %v1187
        %1205 = vmatprep.subr.bf16.mxu0 0
        %1206 = vmatpush2.bf16.xpose.msra.mxu0 0
        %1207 = vmatprep.subr.bf16.mxu0 0
        %1208 = vmatpush2.bf16.xpose.msra.mxu0 0
        %1209 = vmatprep.subr.bf16.mxu0 0
        %1210 = vmatpush2.bf16.xpose.msra.mxu0 0
        %1211 = vmatprep.subr.bf16.mxu0 0
        %1212 = vmatpush2.bf16.xpose.msra.mxu0 0
        %1213 = vmatprep.subr.bf16.mxu0 0
        %1214 = vmatpush2.bf16.xpose.msra.mxu0 0
        %1215 = vmatprep.subr.bf16.mxu0 0
        %1216 = vmatpush2.bf16.xpose.msra.mxu0 0
        %1217 = vmatprep.subr.bf16.mxu0 0
        %1218 = vmatpush2.bf16.xpose.msra.mxu0 0
        %1219 = vmatprep.subr.bf16.mxu0 0
        %1220 = vmatpush2.bf16.xpose.msra.mxu0 0
        %1221 = vmatprep.mubr.bf16.mxu0 0
        %1222 = vmatmul.mubr.bf16.gmra.mxu0 %v1184
        %v1223 = vpop.f32.mrf.mxu0
        %v1224 = vadd.f32 0.0, %v1223
        %v1225 = vpop.f32.mrf.mxu0
        %v1226 = vpop.f32.mrf.mxu0
        %v1227 = vpop.f32.mrf.mxu0
        %1228 = vdwg.mxu0
        %v1229 = vsel %vm833, -1e+09, %v1224
        %v1230 = vsel %vm947, %v1229, -inf
        %1231 = vmax.xlane.f32.xlu0 %v1230
        %v1232 = vpop.xlane.xlu0 %1231
        %v1233 = vsub.f32 %v1229, %v1232
        %v1234 = vmul.f32 %v1233, 1.442695
        %v1235 = vpow.pop %v1234
        %v1236 = vsel %vm947, %v1235, 0.0
        %1237 = vadd.xlane.f32.xlu0 %v1236
        %v1238 = vpop.xlane.xlu0 %1237
        %v1239 = vrcp.pop %v1238
        %v1240 = vmul.f32 %v1235, %v1239
        %v1241 = vpack.c.bf16 %v1240, %v1240
        %1242 = vrot.lane.b32.xlu0 %v932, 48
        %v1243 = vpop.permute.xlu0 %1242
        %v1245 = vsel %vm947, %v1241, 0
        %v1248 = vsel %vm1012, %v1243, 0
        %1250 = vmatprep.subr.bf16.mxu0 0
        %1251 = vmatpush1.bf16.msra.mxu0 0
        %1252 = vmatprep.subr.bf16.mxu0 0
        %1253 = vmatpush1.bf16.msra.mxu0 0
        %1254 = vmatprep.subr.bf16.mxu0 0
        %1255 = vmatpush1.bf16.msra.mxu0 0
        %1256 = vmatprep.subr.bf16.mxu0 0
        %1257 = vmatpush1.bf16.msra.mxu0 0
        %1258 = vmatprep.subr.bf16.mxu0 0
        %1259 = vmatpush1.bf16.msra.mxu0 0
        %1260 = vmatprep.subr.bf16.mxu0 0
        %1261 = vmatpush1.bf16.msra.mxu0 0
        %1262 = vmatprep.subr.bf16.mxu0 0
        %1263 = vmatpush1.bf16.msra.mxu0 0
        %1264 = vmatprep.subr.bf16.mxu0 0
        %1265 = vmatpush1.bf16.msra.mxu0 %v1248
        %1266 = vmatprep.subr.bf16.mxu0 0
        %1267 = vmatpush2.bf16.msra.mxu0 0
        %1268 = vmatprep.subr.bf16.mxu0 0
        %1269 = vmatpush2.bf16.msra.mxu0 0
        %1270 = vmatprep.subr.bf16.mxu0 0
        %1271 = vmatpush2.bf16.msra.mxu0 0
        %1272 = vmatprep.subr.bf16.mxu0 0
        %1273 = vmatpush2.bf16.msra.mxu0 0
        %1274 = vmatprep.subr.bf16.mxu0 0
        %1275 = vmatpush2.bf16.msra.mxu0 0
        %1276 = vmatprep.subr.bf16.mxu0 0
        %1277 = vmatpush2.bf16.msra.mxu0 0
        %1278 = vmatprep.subr.bf16.mxu0 0
        %1279 = vmatpush2.bf16.msra.mxu0 0
        %1280 = vmatprep.subr.bf16.mxu0 0
        %1281 = vmatpush2.bf16.msra.mxu0 0
        %1282 = vmatprep.mubr.bf16.mxu0 0
        %1283 = vmatmul.mubr.bf16.gmra.mxu0 %v1245
        %v1284 = vpop.f32.mrf.mxu0
        %v1285 = vadd.f32 0.0, %v1284
        %v1286 = vpop.f32.mrf.mxu0
        %v1287 = vpop.f32.mrf.mxu0
        %v1288 = vpop.f32.mrf.mxu0
        %1289 = vdwg.mxu0
        %v1290 = vpack.c.bf16 %v1285, %v1285
        %v1292 = vunpack.c.l.b16 %v1290
        %v1293 = vpack.c.b16 %v1292, %v1292
        %1294 = vrot.lane.b32.xlu0 %v1293, 16
        %v1295 = vpop.permute.xlu0 %1294
        %vm1297 = vcmask 191616
        %1298 = vst.msk [vmem:[#allocation2] sm:$0xf] %vm1297, %v1295
        %1299 = vrot.lane.b32.xlu0 %v932, 104
        %v1300 = vpop.permute.xlu0 %1299
        %1301 = vrot.lane.b32.xlu0 %v932, 72
        %v1302 = vpop.permute.xlu0 %1301
        %v1304 = vsel %vm947, %v1300, 0
        %v1307 = vsel %vm947, %v1302, 0
        %1309 = vmatprep.subr.bf16.mxu0 0
        %1310 = vmatpush1.bf16.xpose.msra.mxu0 0
        %1311 = vmatprep.subr.bf16.mxu0 0
        %1312 = vmatpush1.bf16.xpose.msra.mxu0 0
        %1313 = vmatprep.subr.bf16.mxu0 0
        %1314 = vmatpush1.bf16.xpose.msra.mxu0 0
        %1315 = vmatprep.subr.bf16.mxu0 0
        %1316 = vmatpush1.bf16.xpose.msra.mxu0 0
        %1317 = vmatprep.subr.bf16.mxu0 0
        %1318 = vmatpush1.bf16.xpose.msra.mxu0 0
        %1319 = vmatprep.subr.bf16.mxu0 0
        %1320 = vmatpush1.bf16.xpose.msra.mxu0 0
        %1321 = vmatprep.subr.bf16.mxu0 0
        %1322 = vmatpush1.bf16.xpose.msra.mxu0 0
        %1323 = vmatprep.subr.bf16.mxu0 0
        %1324 = vmatpush1.bf16.xpose.msra.mxu0 %v1307
        %1325 = vmatprep.subr.bf16.mxu0 0
        %1326 = vmatpush2.bf16.xpose.msra.mxu0 0
        %1327 = vmatprep.subr.bf16.mxu0 0
        %1328 = vmatpush2.bf16.xpose.msra.mxu0 0
        %1329 = vmatprep.subr.bf16.mxu0 0
        %1330 = vmatpush2.bf16.xpose.msra.mxu0 0
        %1331 = vmatprep.subr.bf16.mxu0 0
        %1332 = vmatpush2.bf16.xpose.msra.mxu0 0
        %1333 = vmatprep.subr.bf16.mxu0 0
        %1334 = vmatpush2.bf16.xpose.msra.mxu0 0
        %1335 = vmatprep.subr.bf16.mxu0 0
        %1336 = vmatpush2.bf16.xpose.msra.mxu0 0
        %1337 = vmatprep.subr.bf16.mxu0 0
        %1338 = vmatpush2.bf16.xpose.msra.mxu0 0
        %1339 = vmatprep.subr.bf16.mxu0 0
        %1340 = vmatpush2.bf16.xpose.msra.mxu0 0
        %1341 = vmatprep.mubr.bf16.mxu0 0
        %1342 = vmatmul.mubr.bf16.gmra.mxu0 %v1304
        %v1343 = vpop.f32.mrf.mxu0
        %v1344 = vadd.f32 0.0, %v1343
        %v1345 = vpop.f32.mrf.mxu0
        %v1346 = vpop.f32.mrf.mxu0
        %v1347 = vpop.f32.mrf.mxu0
        %1348 = vdwg.mxu0
        %v1349 = vsel %vm833, -1e+09, %v1344
        %v1350 = vsel %vm947, %v1349, -inf
        %1351 = vmax.xlane.f32.xlu0 %v1350
        %v1352 = vpop.xlane.xlu0 %1351
        %v1353 = vsub.f32 %v1349, %v1352
        %v1354 = vmul.f32 %v1353, 1.442695
        %v1355 = vpow.pop %v1354
        %v1356 = vsel %vm947, %v1355, 0.0
        %1357 = vadd.xlane.f32.xlu0 %v1356
        %v1358 = vpop.xlane.xlu0 %1357
        %v1359 = vrcp.pop %v1358
        %v1360 = vmul.f32 %v1355, %v1359
        %v1361 = vpack.c.bf16 %v1360, %v1360
        %1362 = vrot.lane.b32.xlu0 %v932, 40
        %v1363 = vpop.permute.xlu0 %1362
        %v1365 = vsel %vm947, %v1361, 0
        %v1368 = vsel %vm1012, %v1363, 0
        %1370 = vmatprep.subr.bf16.mxu0 0
        %1371 = vmatpush1.bf16.msra.mxu0 0
        %1372 = vmatprep.subr.bf16.mxu0 0
        %1373 = vmatpush1.bf16.msra.mxu0 0
        %1374 = vmatprep.subr.bf16.mxu0 0
        %1375 = vmatpush1.bf16.msra.mxu0 0
        %1376 = vmatprep.subr.bf16.mxu0 0
        %1377 = vmatpush1.bf16.msra.mxu0 0
        %1378 = vmatprep.subr.bf16.mxu0 0
        %1379 = vmatpush1.bf16.msra.mxu0 0
        %1380 = vmatprep.subr.bf16.mxu0 0
        %1381 = vmatpush1.bf16.msra.mxu0 0
        %1382 = vmatprep.subr.bf16.mxu0 0
        %1383 = vmatpush1.bf16.msra.mxu0 0
        %1384 = vmatprep.subr.bf16.mxu0 0
        %1385 = vmatpush1.bf16.msra.mxu0 %v1368
        %1386 = vmatprep.subr.bf16.mxu0 0
        %1387 = vmatpush2.bf16.msra.mxu0 0
        %1388 = vmatprep.subr.bf16.mxu0 0
        %1389 = vmatpush2.bf16.msra.mxu0 0
        %1390 = vmatprep.subr.bf16.mxu0 0
        %1391 = vmatpush2.bf16.msra.mxu0 0
        %1392 = vmatprep.subr.bf16.mxu0 0
        %1393 = vmatpush2.bf16.msra.mxu0 0
        %1394 = vmatprep.subr.bf16.mxu0 0
        %1395 = vmatpush2.bf16.msra.mxu0 0
        %1396 = vmatprep.subr.bf16.mxu0 0
        %1397 = vmatpush2.bf16.msra.mxu0 0
        %1398 = vmatprep.subr.bf16.mxu0 0
        %1399 = vmatpush2.bf16.msra.mxu0 0
        %1400 = vmatprep.subr.bf16.mxu0 0
        %1401 = vmatpush2.bf16.msra.mxu0 0
        %1402 = vmatprep.mubr.bf16.mxu0 0
        %1403 = vmatmul.mubr.bf16.gmra.mxu0 %v1365
        %v1404 = vpop.f32.mrf.mxu0
        %v1405 = vadd.f32 0.0, %v1404
        %v1406 = vpop.f32.mrf.mxu0
        %v1407 = vpop.f32.mrf.mxu0
        %v1408 = vpop.f32.mrf.mxu0
        %1409 = vdwg.mxu0
        %v1410 = vpack.c.bf16 %v1405, %v1405
        %v1412 = vunpack.c.l.b16 %v1410
        %v1413 = vpack.c.b16 %v1412, %v1412
        %1414 = vrot.lane.b32.xlu0 %v1413, 24
        %v1415 = vpop.permute.xlu0 %1414
        %vm1417 = vcmask 257216
        %1418 = vst.msk [vmem:[#allocation2] sm:$0xf] %vm1417, %v1415
        %v1419 = vld [vmem:[#allocation2] sm:$0xf]
        %v1420 = vld [vmem:[%s785] sm:$0xf]
        %v1421 = vld [vmem:[%s785 + $0x4] sm:$0xf]
        %v1422 = vld [vmem:[%s785 + $0x8] sm:$0xf]
        %v1423 = vld [vmem:[%s785 + $0xc] sm:$0xf]
        %v1424 = vld [vmem:[%s788] sm:$0x1]
        %v1426 = vlaneseq
        %v1427 = vshrl.u32 %v1426, 7
        %v1428 = vsub.s32 0, %v1427
        %v1429 = vrot.slane %v1424, %v1428
        %v1435 = vunpack.c.l.b16 %v1420
        %v1436 = vunpack.c.l.b16 %v1421
        %v1437 = vunpack.c.l.b16 %v1422
        %v1438 = vunpack.c.l.b16 %v1423
        %v1439 = vpack.c.b16 %v1436, %v1435
        %v1440 = vpack.c.b16 %v1438, %v1437
        %v1444 = vsel %vm836, %v1419, 0
        %1446 = vmatprep.subr.bf16.mxu0 0
        %1447 = vmatpush1.bf16.msra.mxu0 0
        %1448 = vmatprep.subr.bf16.mxu0 0
        %1449 = vmatpush1.bf16.msra.mxu0 0
        %1450 = vmatprep.subr.bf16.mxu0 0
        %1451 = vmatpush1.bf16.msra.mxu0 0
        %1452 = vmatprep.subr.bf16.mxu0 0
        %1453 = vmatpush1.bf16.msra.mxu0 0
        %1454 = vmatprep.subr.bf16.mxu0 0
        %1455 = vmatpush1.bf16.msra.mxu0 0
        %1456 = vmatprep.subr.bf16.mxu0 0
        %1457 = vmatpush1.bf16.msra.mxu0 0
        %1458 = vmatprep.subr.bf16.mxu0 0
        %1459 = vmatpush1.bf16.msra.mxu0 %v1440
        %1460 = vmatprep.subr.bf16.mxu0 0
        %1461 = vmatpush1.bf16.msra.mxu0 %v1439
        %1462 = vmatprep.subr.bf16.mxu0 0
        %1463 = vmatpush2.bf16.msra.mxu0 0
        %1464 = vmatprep.subr.bf16.mxu0 0
        %1465 = vmatpush2.bf16.msra.mxu0 0
        %1466 = vmatprep.subr.bf16.mxu0 0
        %1467 = vmatpush2.bf16.msra.mxu0 0
        %1468 = vmatprep.subr.bf16.mxu0 0
        %1469 = vmatpush2.bf16.msra.mxu0 0
        %1470 = vmatprep.subr.bf16.mxu0 0
        %1471 = vmatpush2.bf16.msra.mxu0 0
        %1472 = vmatprep.subr.bf16.mxu0 0
        %1473 = vmatpush2.bf16.msra.mxu0 0
        %1474 = vmatprep.subr.bf16.mxu0 0
        %1475 = vmatpush2.bf16.msra.mxu0 0
        %1476 = vmatprep.subr.bf16.mxu0 0
        %1477 = vmatpush2.bf16.msra.mxu0 0
        %1478 = vmatprep.mubr.bf16.mxu0 0
        %1479 = vmatmul.mubr.bf16.gmra.mxu0 %v1444
        %v1480 = vpop.f32.mrf.mxu0
        %v1481 = vadd.f32 %v1429, %v1480
        %v1482 = vpop.f32.mrf.mxu0
        %v1483 = vpop.f32.mrf.mxu0
        %v1484 = vpop.f32.mrf.mxu0
        %1485 = vdwg.mxu0
        %v1486 = vadd.f32 %v819, %v1481
        %v1487 = vld [vmem:[%s791] sm:$0x1]
        %v1488 = vld [vmem:[%s794] sm:$0x1]
        %v1489 = vsel %vm836, %v1486, 0.0
        %1490 = vadd.xlane.f32.xlu0 %v1489
        %v1491 = vpop.xlane.xlu0 %1490
        %v1492 = vmul.f32 %v1491, %v840
        %v1493 = vsub.f32 %v1486, %v1492
        %v1494 = vmul.f32 %v1493, %v1493
        %v1495 = vsel %vm836, %v1494, 0.0
        %1496 = vadd.xlane.f32.xlu0 %v1495
        %v1497 = vpop.xlane.xlu0 %1496
        %v1498 = vmul.f32 %v1497, %v840
        %v1499 = vadd.f32 %v1498, 1e-05
        %v1500 = vrsqrt.pop %v1499
        %v1501 = vmul.f32 %v1493, %v1500
        %v1503 = vlaneseq
        %v1504 = vshrl.u32 %v1503, 7
        %v1505 = vsub.s32 0, %v1504
        %v1506 = vrot.slane %v1487, %v1505
        %v1508 = vmul.f32 %v1501, %v1506
        %v1510 = vlaneseq
        %v1511 = vshrl.u32 %v1510, 7
        %v1512 = vsub.s32 0, %v1511
        %v1513 = vrot.slane %v1488, %v1512
        %v1515 = vadd.f32 %v1508, %v1513
        %v1516 = vpack.c.bf16 %v1515, %v1515
        %v1517 = vld [vmem:[%s799] sm:$0xf]
        %v1518 = vld [vmem:[%s799 + $0x4] sm:$0xf]
        %v1519 = vld [vmem:[%s799 + $0x8] sm:$0xf]
        %v1520 = vld [vmem:[%s799 + $0xc] sm:$0xf]
        %v1521 = vld [vmem:[%s802] sm:$0x1]
        %v1523 = vlaneseq
        %v1524 = vshrl.u32 %v1523, 7
        %v1525 = vsub.s32 0, %v1524
        %v1526 = vrot.slane %v1521, %v1525
        %v1532 = vunpack.c.l.b16 %v1517
        %v1533 = vunpack.c.l.b16 %v1518
        %v1534 = vunpack.c.l.b16 %v1519
        %v1535 = vunpack.c.l.b16 %v1520
        %v1536 = vpack.c.b16 %v1533, %v1532
        %v1537 = vpack.c.b16 %v1535, %v1534
        %v1541 = vsel %vm836, %v1516, 0
        %1543 = vmatprep.subr.bf16.mxu0 0
        %1544 = vmatpush1.bf16.msra.mxu0 0
        %1545 = vmatprep.subr.bf16.mxu0 0
        %1546 = vmatpush1.bf16.msra.mxu0 0
        %1547 = vmatprep.subr.bf16.mxu0 0
        %1548 = vmatpush1.bf16.msra.mxu0 0
        %1549 = vmatprep.subr.bf16.mxu0 0
        %1550 = vmatpush1.bf16.msra.mxu0 0
        %1551 = vmatprep.subr.bf16.mxu0 0
        %1552 = vmatpush1.bf16.msra.mxu0 0
        %1553 = vmatprep.subr.bf16.mxu0 0
        %1554 = vmatpush1.bf16.msra.mxu0 0
        %1555 = vmatprep.subr.bf16.mxu0 0
        %1556 = vmatpush1.bf16.msra.mxu0 %v1537
        %1557 = vmatprep.subr.bf16.mxu0 0
        %1558 = vmatpush1.bf16.msra.mxu0 %v1536
        %1559 = vmatprep.subr.bf16.mxu0 0
        %1560 = vmatpush2.bf16.msra.mxu0 0
        %1561 = vmatprep.subr.bf16.mxu0 0
        %1562 = vmatpush2.bf16.msra.mxu0 0
        %1563 = vmatprep.subr.bf16.mxu0 0
        %1564 = vmatpush2.bf16.msra.mxu0 0
        %1565 = vmatprep.subr.bf16.mxu0 0
        %1566 = vmatpush2.bf16.msra.mxu0 0
        %1567 = vmatprep.subr.bf16.mxu0 0
        %1568 = vmatpush2.bf16.msra.mxu0 0
        %1569 = vmatprep.subr.bf16.mxu0 0
        %1570 = vmatpush2.bf16.msra.mxu0 0
        %1571 = vmatprep.subr.bf16.mxu0 0
        %1572 = vmatpush2.bf16.msra.mxu0 0
        %1573 = vmatprep.subr.bf16.mxu0 0
        %1574 = vmatpush2.bf16.msra.mxu0 0
        %1575 = vmatprep.mubr.bf16.mxu0 0
        %1576 = vmatmul.mubr.bf16.gmra.mxu0 %v1541
        %v1577 = vpop.f32.mrf.mxu0
        %v1578 = vadd.f32 %v1526, %v1577
        %v1579 = vpop.f32.mrf.mxu0
        %v1580 = vpop.f32.mrf.mxu0
        %v1581 = vpop.f32.mrf.mxu0
        %1582 = vdwg.mxu0
        %v1583 = vsub.f32 0.0, %v1578
        %v1584 = vmul.f32 %v1583, 1.442695
        %v1585 = vpow.pop %v1584
        %v1586 = vadd.f32 %v1585, 1.0
        %v1587 = vrcp.pop %v1586
        %v1588 = vmul.f32 1.0, %v1587
        %v1589 = vmul.f32 %v1578, %v1588
        %v1590 = vpack.c.bf16 %v1589, %v1589
        %v1591 = vld [vmem:[%s807] sm:$0xf]
        %v1592 = vld [vmem:[%s807 + $0x4] sm:$0xf]
        %v1593 = vld [vmem:[%s807 + $0x8] sm:$0xf]
        %v1594 = vld [vmem:[%s807 + $0xc] sm:$0xf]
        %v1595 = vld [vmem:[%s807 + $0x10] sm:$0xf]
        %v1596 = vld [vmem:[%s807 + $0x14] sm:$0xf]
        %v1597 = vld [vmem:[%s807 + $0x18] sm:$0xf]
        %v1598 = vld [vmem:[%s807 + $0x1c] sm:$0xf]
        %v1599 = vld [vmem:[%s807 + $0x20] sm:$0xf]
        %v1600 = vld [vmem:[%s807 + $0x24] sm:$0xf]
        %v1601 = vld [vmem:[%s807 + $0x28] sm:$0xf]
        %v1602 = vld [vmem:[%s807 + $0x2c] sm:$0xf]
        %v1603 = vld [vmem:[%s807 + $0x30] sm:$0xf]
        %v1604 = vld [vmem:[%s807 + $0x34] sm:$0xf]
        %v1605 = vld [vmem:[%s807 + $0x38] sm:$0xf]
        %v1606 = vld [vmem:[%s807 + $0x3c] sm:$0xf]
        %v1623 = vunpack.c.l.b16 %v1591
        %v1624 = vunpack.c.l.b16 %v1592
        %v1625 = vunpack.c.l.b16 %v1593
        %v1626 = vunpack.c.l.b16 %v1594
        %v1627 = vunpack.c.l.b16 %v1595
        %v1628 = vunpack.c.l.b16 %v1596
        %v1629 = vunpack.c.l.b16 %v1597
        %v1630 = vunpack.c.l.b16 %v1598
        %v1631 = vunpack.c.l.b16 %v1599
        %v1632 = vunpack.c.l.b16 %v1600
        %v1633 = vunpack.c.l.b16 %v1601
        %v1634 = vunpack.c.l.b16 %v1602
        %v1635 = vunpack.c.l.b16 %v1603
        %v1636 = vunpack.c.l.b16 %v1604
        %v1637 = vunpack.c.l.b16 %v1605
        %v1638 = vunpack.c.l.b16 %v1606
        %v1639 = vpack.c.b16 %v1624, %v1623
        %v1640 = vpack.c.b16 %v1626, %v1625
        %v1641 = vpack.c.b16 %v1628, %v1627
        %v1642 = vpack.c.b16 %v1630, %v1629
        %v1643 = vpack.c.b16 %v1632, %v1631
        %v1644 = vpack.c.b16 %v1634, %v1633
        %v1645 = vpack.c.b16 %v1636, %v1635
        %v1646 = vpack.c.b16 %v1638, %v1637
        %1655 = vmatprep.subr.bf16.mxu0 0
        %1656 = vmatpush1.bf16.msra.mxu0 %v1646
        %1657 = vmatprep.subr.bf16.mxu0 0
        %1658 = vmatpush1.bf16.msra.mxu0 %v1645
        %1659 = vmatprep.subr.bf16.mxu0 0
        %1660 = vmatpush1.bf16.msra.mxu0 %v1644
        %1661 = vmatprep.subr.bf16.mxu0 0
        %1662 = vmatpush1.bf16.msra.mxu0 %v1643
        %1663 = vmatprep.subr.bf16.mxu0 0
        %1664 = vmatpush1.bf16.msra.mxu0 %v1642
        %1665 = vmatprep.subr.bf16.mxu0 0
        %1666 = vmatpush1.bf16.msra.mxu0 %v1641
        %1667 = vmatprep.subr.bf16.mxu0 0
        %1668 = vmatpush1.bf16.msra.mxu0 %v1640
        %1669 = vmatprep.subr.bf16.mxu0 0
        %1670 = vmatpush1.bf16.msra.mxu0 %v1639
        %1671 = vmatprep.subr.bf16.mxu0 0
        %1672 = vmatpush2.bf16.msra.mxu0 0
        %1673 = vmatprep.subr.bf16.mxu0 0
        %1674 = vmatpush2.bf16.msra.mxu0 0
        %1675 = vmatprep.subr.bf16.mxu0 0
        %1676 = vmatpush2.bf16.msra.mxu0 0
        %1677 = vmatprep.subr.bf16.mxu0 0
        %1678 = vmatpush2.bf16.msra.mxu0 0
        %1679 = vmatprep.subr.bf16.mxu0 0
        %1680 = vmatpush2.bf16.msra.mxu0 0
        %1681 = vmatprep.subr.bf16.mxu0 0
        %1682 = vmatpush2.bf16.msra.mxu0 0
        %1683 = vmatprep.subr.bf16.mxu0 0
        %1684 = vmatpush2.bf16.msra.mxu0 0
        %1685 = vmatprep.subr.bf16.mxu0 0
        %1686 = vmatpush2.bf16.msra.mxu0 0
        %1687 = vmatprep.mubr.bf16.mxu0 0
        %1688 = vmatmul.mubr.bf16.gmra.mxu0 %v1590
        %v1689 = vpop.f32.mrf.mxu0
        %v1690 = vadd.f32 0.0, %v1689
        %v1691 = vpop.f32.mrf.mxu0
        %v1692 = vpop.f32.mrf.mxu0
        %v1693 = vpop.f32.mrf.mxu0
        %1694 = vdwg.mxu0
        %v1695 = vadd.f32 %v1486, %v1690
        %v1696 = vld [vmem:[%s810] sm:$0x1]
        %v1698 = vlaneseq
        %v1699 = vshrl.u32 %v1698, 7
        %v1700 = vsub.s32 0, %v1699
        %v1701 = vrot.slane %v1696, %v1700
        %v1703 = vadd.f32 %v1695, %v1701
        %1704 = vst.msk [vmem:[%s745] sm:$0xff] %vm836, %v1703
        %p1705 = scmp.eq.s32.totalorder %s41, 1
        // Predicated region
        $region89: #{tpu_custom_call.1} parent=83 // pred_check
          %p1706 = pneg %p1705
        $region90: #{tpu_custom_call.1} parent=83 // pred_check_branch
          %1708 = sbr.rel (%p1706) target = $region92
        $region91: #{tpu_custom_call.1} parent=83 // pred_region
          %v1709 = vld [vmem:[%s14] sm:$0x1]
          %v1710 = vld [vmem:[%s15] sm:$0x1]
          %v1711 = vsel %vm836, %v1703, 0.0
          %1712 = vadd.xlane.f32.xlu0 %v1711
          %v1713 = vpop.xlane.xlu0 %1712
          %v1714 = vmul.f32 %v1713, %v840
          %v1715 = vsub.f32 %v1703, %v1714
          %v1716 = vmul.f32 %v1715, %v1715
          %v1717 = vsel %vm836, %v1716, 0.0
          %1718 = vadd.xlane.f32.xlu0 %v1717
          %v1719 = vpop.xlane.xlu0 %1718
          %v1720 = vmul.f32 %v1719, %v840
          %v1721 = vadd.f32 %v1720, 1e-05
          %v1722 = vrsqrt.pop %v1721
          %v1723 = vmul.f32 %v1715, %v1722
          %v1725 = vlaneseq
          %v1726 = vshrl.u32 %v1725, 7
          %v1727 = vsub.s32 0, %v1726
          %v1728 = vrot.slane %v1709, %v1727
          %v1730 = vmul.f32 %v1723, %v1728
          %v1732 = vlaneseq
          %v1733 = vshrl.u32 %v1732, 7
          %v1734 = vsub.s32 0, %v1733
          %v1735 = vrot.slane %v1710, %v1734
          %v1737 = vadd.f32 %v1730, %v1735
          %1738 = vst.msk [vmem:[%s745] sm:$0xff] %vm836, %v1737
        $region92: #{tpu_custom_call.1} parent=83 // pred_fallthru
          _
        %s1739 = sand.u32 %s462, 1
        %s1740 = scalar_lea.sflag [#allocation4], %s1739
        %s1741 = sand.u32 %s462, 1
        %s1742 = smul.addr %s1741, 8
        %s1743 = scalar_lea.vmem [#allocation3], %s1742
        %s1744 = sand.u32 %s36, 1
        %s1745 = scalar_lea.sflag [#allocation6], %s1744
        %s1746 = sand.u32 %s490, 1
        %s1747 = smul.addr %s1746, 4
        %s1748 = scalar_lea.vmem [#allocation5], %s1747
        %s1749 = sand.u32 %s36, 1
        %s1750 = scalar_lea.sflag [#allocation6], %s1749
        %s1751 = sand.u32 %s518, 1
        %s1752 = smul.addr %s1751, 4
        %s1753 = scalar_lea.vmem [#allocation7], %s1752
        // Predicated region
        $region93: #{tpu_custom_call.1} parent=83 // pred_check
          %p1754 = pneg %p472
        $region94: #{tpu_custom_call.1} parent=83 // pred_check_branch
          %1756 = sbr.rel (%p1754) target = $region96
        $region95: #{tpu_custom_call.1} parent=83 // pred_region
          %s1758 = ssub.s32 128, 128
          %1759 = vsyncadd %s1740, %s1758
          %s1760 = smul.addr %s40, 128
          %s1761 = scalar_lea.hbm %s16, %s1760
          %s1763 = sshll.u32 %s1743, 4
          %s1764 = int_to_ptr.vmem [resolvable:$true] %s1763
          %1766 = dma.vmem_to_hbm [thread:$0]  %s1764, 128, %s1761, %s1740
        $region96: #{tpu_custom_call.1} parent=83 // pred_fallthru
          _
        // Predicated region
        $region97: #{tpu_custom_call.1} parent=83 // pred_check
          %p1767 = pneg %p500
        $region98: #{tpu_custom_call.1} parent=83 // pred_check_branch
          %1769 = sbr.rel (%p1767) target = $region100
        $region99: #{tpu_custom_call.1} parent=83 // pred_region
          %s1771 = ssub.s32 64, 64
          %1772 = vsyncadd %s1745, %s1771
          %s1773 = smul.addr %s40, 2
          %s1774 = sadd.s32 %s41, %s1773
          %s1775 = smul.addr %s1774, 64
          %s1776 = scalar_lea.hbm %s17, %s1775
          %s1778 = sshll.u32 %s1748, 4
          %s1779 = int_to_ptr.vmem [resolvable:$true] %s1778
          %1781 = dma.vmem_to_hbm [thread:$0]  %s1779, 64, %s1776, %s1745
        $region100: #{tpu_custom_call.1} parent=83 // pred_fallthru
          _
        // Predicated region
        $region101: #{tpu_custom_call.1} parent=83 // pred_check
          %p1782 = pneg %p528
        $region102: #{tpu_custom_call.1} parent=83 // pred_check_branch
          %1784 = sbr.rel (%p1782) target = $region104
        $region103: #{tpu_custom_call.1} parent=83 // pred_region
          %s1786 = ssub.s32 64, 64
          %1787 = vsyncadd %s1750, %s1786
          %s1788 = smul.addr %s40, 2
          %s1789 = sadd.s32 %s41, %s1788
          %s1790 = smul.addr %s1789, 64
          %s1791 = scalar_lea.hbm %s18, %s1790
          %s1793 = sshll.u32 %s1753, 4
          %s1794 = int_to_ptr.vmem [resolvable:$true] %s1793
          %1796 = dma.vmem_to_hbm [thread:$0]  %s1794, 64, %s1791, %s1750
        $region104: #{tpu_custom_call.1} parent=83 // pred_fallthru
          _
      $region84: #{tpu_custom_call.1} parent=5 // pred_fallthru
        _
      %p1797 = scmp.le.s32.totalorder 2, %s31
      // Predicated region
      $region105: #{tpu_custom_call.1} parent=5 // pred_check
        %p1798 = pneg %p1797
      $region106: #{tpu_custom_call.1} parent=5 // pred_check_branch
        %1800 = sbr.rel (%p1798) target = $region108
      $region107: #{tpu_custom_call.1} parent=5 // pred_region
        %s1801 = ssub.s32 %s31, 2
        // Predicated region
        $region109: #{tpu_custom_call.1} parent=107 // pred_check
          %p1802 = pneg %p478
        $region110: #{tpu_custom_call.1} parent=107 // pred_check_branch
          %1804 = sbr.rel (%p1802) target = $region112
        $region111: #{tpu_custom_call.1} parent=107 // pred_region
          %s1805 = sand.u32 %s463, 1
          %s1806 = scalar_lea.sflag [#allocation4], %s1805
          %s1807 = sand.u32 %s463, 1
          %s1808 = smul.addr %s1807, 8
          %s1809 = scalar_lea.vmem [#allocation3], %s1808
          %1810 = dma.done %s1806, 128
        $region112: #{tpu_custom_call.1} parent=107 // pred_fallthru
          _
        // Predicated region
        $region113: #{tpu_custom_call.1} parent=107 // pred_check
          %p1811 = pneg %p506
        $region114: #{tpu_custom_call.1} parent=107 // pred_check_branch
          %1813 = sbr.rel (%p1811) target = $region116
        $region115: #{tpu_custom_call.1} parent=107 // pred_region
          %s1814 = sand.u32 %s37, 1
          %s1815 = scalar_lea.sflag [#allocation6], %s1814
          %s1816 = sand.u32 %s491, 1
          %s1817 = smul.addr %s1816, 4
          %s1818 = scalar_lea.vmem [#allocation5], %s1817
          %1819 = dma.done %s1815, 64
        $region116: #{tpu_custom_call.1} parent=107 // pred_fallthru
          _
        // Predicated region
        $region117: #{tpu_custom_call.1} parent=107 // pred_check
          %p1820 = pneg %p534
        $region118: #{tpu_custom_call.1} parent=107 // pred_check_branch
          %1822 = sbr.rel (%p1820) target = $region120
        $region119: #{tpu_custom_call.1} parent=107 // pred_region
          %s1823 = sand.u32 %s37, 1
          %s1824 = scalar_lea.sflag [#allocation6], %s1823
          %s1825 = sand.u32 %s519, 1
          %s1826 = smul.addr %s1825, 4
          %s1827 = scalar_lea.vmem [#allocation7], %s1826
          %1828 = dma.done %s1824, 64
        $region120: #{tpu_custom_call.1} parent=107 // pred_fallthru
          _
      $region108: #{tpu_custom_call.1} parent=5 // pred_fallthru
        _
    $region6: #{tpu_custom_call.1} parent=1 // loop_footer
      %s35 = sadd.s32 1, %s31
    $region7: #{tpu_custom_call.1} parent=1 // loop_footer_branch
      %30 = sbr.rel target = $region3
    $region8: #{tpu_custom_call.1} parent=1 // loop_exit
      _
    %1829 = vsyncpa [#allocation4], 1
    %s1830 = scalar_lea.sflag [#allocation4], 1
    %1831 = vsyncpa %s1830, 1
    %1832 = vsyncpa [#allocation6], 1
    %s1833 = scalar_lea.sflag [#allocation6], 1
    %1834 = vsyncpa %s1833, 1

</llo_original>
